<compile_context>
chip_gen: v6e
topology: v6e:2x2x1
jax: 0.10.0
libtpu: 0.0.40
codegen_flags: <defaults>
</compile_context>

<pallas_src>
import jax
import jax.numpy as jnp
from jax.experimental import pallas as pl
from jax.experimental.pallas import tpu as pltpu

INPUT_DIM = 13
FC1_OUTCHANNELS = 14
FC2_OUTCHANNELS = 8
OUTPUT_DIM = 1

# Packed-parameter layout (rows aligned to sublane multiples of 8):
#   rows  0:14 -> [ w1 (14,13) | b1 (14,1) | 0 ]
#   rows 16:24 -> [ w2 (8,14)  | b2 (8,1)  | 0 ]
#   row     24 -> [ w3 (1,8)   | b3 (1,1)  | 0 ]
_P_ROWS, _P_COLS = 32, 16
_L1_ROW, _L2_ROW, _L3_ROW = 0, 16, 24

_LANE = 128


def _round_up(n, m):
    return ((n + m - 1) // m) * m


def _mlp_kernel(x_ref, p_ref, o_ref):
    hi = jax.lax.Precision.HIGHEST

    x = x_ref[...]                                   # (TB, 13) batch-major, native HBM layout
    p = p_ref[...]                                   # (32, 16) packed params (resident in VMEM)

    w1 = p[_L1_ROW:_L1_ROW + FC1_OUTCHANNELS, 0:INPUT_DIM]                       # (14, 13)
    b1 = p[_L1_ROW:_L1_ROW + FC1_OUTCHANNELS, INPUT_DIM:INPUT_DIM + 1]           # (14, 1)
    w2 = p[_L2_ROW:_L2_ROW + FC2_OUTCHANNELS, 0:FC1_OUTCHANNELS]                 # (8, 14)
    b2 = p[_L2_ROW:_L2_ROW + FC2_OUTCHANNELS, FC1_OUTCHANNELS:FC1_OUTCHANNELS + 1]
    w3 = p[_L3_ROW:_L3_ROW + OUTPUT_DIM, 0:FC2_OUTCHANNELS]                      # (1, 8)
    b3 = p[_L3_ROW:_L3_ROW + OUTPUT_DIM, FC2_OUTCHANNELS:FC2_OUTCHANNELS + 1]

    # Layer 1: contract the feature dims of w1 (dim 1) and x (dim 1) so h1 is
    # feature-major (14, TB) — the batch->lane transpose stays VMEM-local
    # instead of being a separate HBM round trip in the wrapper.
    h1 = jax.lax.dot_general(w1, x, (((1,), (1,)), ((), ())),
                             precision=hi, preferred_element_type=jnp.float32)
    h1 = jnp.maximum(h1 + b1, 0.0)                                               # (14, TB)

    h2 = jnp.dot(w2, h1, precision=hi, preferred_element_type=jnp.float32)
    h2 = jnp.maximum(h2 + b2, 0.0)                                               # (8, TB)

    z = jnp.dot(w3, h2, precision=hi, preferred_element_type=jnp.float32) + b3   # (1, TB)
    o_ref[...] = jax.nn.sigmoid(z).astype(o_ref.dtype)                           # lane-dense store


def mlp_forward(x, params, tile_b=16384):
    """x: (B, INPUT_DIM) f32.

    params: dict with PyTorch-native layouts:
        w1 (14,13) b1 (14,1)   w2 (8,14) b2 (8,1)   w3 (1,8) b3 (1,1)
    Returns (B, OUTPUT_DIM) f32.
    """
    B = x.shape[0]

    # Tile selection: lane-dense multiples of 128, don't over-tile tiny
    # batches, and give v7x's two TensorCores >=2 grid steps for large B.
    if B <= _LANE:
        tile_b = max(8, _round_up(B, 8))            # one small, in-bounds tile
    else:
        tile_b = max(_LANE, min(tile_b, _round_up(B, _LANE)))
        if B >= 2 * _LANE:
            tile_b = min(tile_b, _round_up(pl.cdiv(B, 2), _LANE))
    n_tiles = pl.cdiv(B, tile_b)
    Bp = n_tiles * tile_b

    # Pack the six tiny weight/bias tensors into one resident VMEM block.
    packed = jnp.zeros((_P_ROWS, _P_COLS), jnp.float32)
    packed = packed.at[_L1_ROW:_L1_ROW + FC1_OUTCHANNELS, 0:INPUT_DIM].set(params["w1"])
    packed = packed.at[_L1_ROW:_L1_ROW + FC1_OUTCHANNELS, INPUT_DIM:INPUT_DIM + 1].set(params["b1"])
    packed = packed.at[_L2_ROW:_L2_ROW + FC2_OUTCHANNELS, 0:FC1_OUTCHANNELS].set(params["w2"])
    packed = packed.at[_L2_ROW:_L2_ROW + FC2_OUTCHANNELS, FC1_OUTCHANNELS:FC1_OUTCHANNELS + 1].set(params["b2"])
    packed = packed.at[_L3_ROW:_L3_ROW + OUTPUT_DIM, 0:FC2_OUTCHANNELS].set(params["w3"])
    packed = packed.at[_L3_ROW:_L3_ROW + OUTPUT_DIM, FC2_OUTCHANNELS:FC2_OUTCHANNELS + 1].set(params["b3"])

    flops = 2 * Bp * (INPUT_DIM * FC1_OUTCHANNELS
                      + FC1_OUTCHANNELS * FC2_OUTCHANNELS
                      + FC2_OUTCHANNELS * OUTPUT_DIM)
    bytes_accessed = Bp * (INPUT_DIM + OUTPUT_DIM) * 4 + _P_ROWS * _P_COLS * 4

    out_t = pl.pallas_call(
        _mlp_kernel,
        out_shape=jax.ShapeDtypeStruct((OUTPUT_DIM, Bp), jnp.float32),
        grid=(n_tiles,),
        in_specs=[
            # Native batch-major input tile — contiguous in HBM, no wrapper copy.
            pl.BlockSpec((tile_b, INPUT_DIM), lambda i: (i, 0)),
            # Packed params: same block every step -> stays resident in VMEM.
            pl.BlockSpec((_P_ROWS, _P_COLS), lambda i: (0, 0)),
        ],
        out_specs=pl.BlockSpec((OUTPUT_DIM, tile_b), lambda i: (0, i)),
        compiler_params=pltpu.CompilerParams(
            dimension_semantics=("parallel",),
            vmem_limit_bytes=40 * 1024 * 1024,
        ),
        cost_estimate=pl.CostEstimate(
            flops=flops,
            transcendentals=Bp,
            bytes_accessed=bytes_accessed,
        ),
    )(x.astype(jnp.float32), packed)

    # Padded tail columns (if any) were computed on clipped/garbage rows and
    # are dropped here; output is tiny (4 B/row) so this slice/transpose is free.
    return out_t[:, :B].T                                                        # (B, 1)


def _xavier_uniform(key, fan_out, fan_in):
    # Matches torch.nn.init.xavier_uniform_; stored (out, in) like nn.Linear.
    bound = (6.0 / (fan_in + fan_out)) ** 0.5
    return jax.random.uniform(key, (fan_out, fan_in), jnp.float32, -bound, bound)


def _linear_bias(key, fan_in, fan_out):
    # nn.Linear default bias init: U(-1/sqrt(fan_in), 1/sqrt(fan_in)); (out, 1).
    bound = 1.0 / (fan_in ** 0.5)
    return jax.random.uniform(key, (fan_out, 1), jnp.float32, -bound, bound)


def init_params(key):
    ks = jax.random.split(key, 6)
    return {
        "w1": _xavier_uniform(ks[0], FC1_OUTCHANNELS, INPUT_DIM),
        "b1": _linear_bias(ks[1], INPUT_DIM, FC1_OUTCHANNELS),
        "w2": _xavier_uniform(ks[2], FC2_OUTCHANNELS, FC1_OUTCHANNELS),
        "b2": _linear_bias(ks[3], FC1_OUTCHANNELS, FC2_OUTCHANNELS),
        "w3": _xavier_uniform(ks[4], OUTPUT_DIM, FC2_OUTCHANNELS),
        "b3": _linear_bias(ks[5], FC2_OUTCHANNELS, OUTPUT_DIM),
    }


if __name__ == "__main__":
    key = jax.random.PRNGKey(0)
    k_x, k_p = jax.random.split(key)

    batch = 8
    x = jax.random.normal(k_x, (batch, INPUT_DIM), jnp.float32)
    params = init_params(k_p)

    out = jax.block_until_ready(mlp_forward(x, params))

    # Plain-JAX reference (same math, same precision, no kernel).
    hi = jax.lax.Precision.HIGHEST

    def ref(x, p):
        h1 = jnp.maximum(jnp.dot(x, p["w1"].T, precision=hi) + p["b1"].T, 0.0)
        h2 = jnp.maximum(jnp.dot(h1, p["w2"].T, precision=hi) + p["b2"].T, 0.0)
        return jax.nn.sigmoid(jnp.dot(h2, p["w3"].T, precision=hi) + p["b3"].T)

    expected = ref(x, params)
    assert out.shape == (batch, OUTPUT_DIM)
    assert jnp.allclose(out, expected, atol=1e-5, rtol=1e-5), (
        float(jnp.max(jnp.abs(out - expected))))

    print("KERNEL_OK")
</pallas_src>

<mosaic_0001>
module attributes {stable_mosaic.version = 11 : i64} {
  func.func @_mlp_kernel(%arg0: i32, %arg1: memref<8x13xf32, #tpu.memory_space<vmem>>, %arg2: memref<32x16xf32, #tpu.memory_space<vmem>>, %arg3: memref<1x8xf32, #tpu.memory_space<vmem>>) attributes {dimension_semantics = [#tpu.dimension_semantics<parallel>], iteration_bounds = array<i64: 1>, scalar_prefetch = 0 : i64, scratch_operands = 0 : i64, tpu.core_type = #tpu.core_type<tc>, window_params = [{transform_indices = @transform_0, window_bounds = array<i64: 8, 13>}, {pipeline_mode = #tpu.pipeline_mode<synchronous>, transform_indices = @transform_1, window_bounds = array<i64: 32, 16>}, {transform_indices = @transform_2, window_bounds = array<i64: 1, 8>}]} {
    %c0 = arith.constant 0 : index
    %c0_0 = arith.constant 0 : index
    %0 = vector.load %arg1[%c0, %c0_0] : memref<8x13xf32, #tpu.memory_space<vmem>>, vector<8x13xf32>
    %c0_1 = arith.constant 0 : index
    %c0_2 = arith.constant 0 : index
    %1 = vector.load %arg2[%c0_1, %c0_2] : memref<32x16xf32, #tpu.memory_space<vmem>>, vector<32x16xf32>
    %2 = vector.extract_strided_slice %1 {offsets = [0, 0], sizes = [14, 13], strides = [1, 1]} : vector<32x16xf32> to vector<14x13xf32>
    %3 = vector.extract_strided_slice %1 {offsets = [0, 13], sizes = [14, 1], strides = [1, 1]} : vector<32x16xf32> to vector<14x1xf32>
    %4 = vector.extract_strided_slice %1 {offsets = [16, 0], sizes = [8, 14], strides = [1, 1]} : vector<32x16xf32> to vector<8x14xf32>
    %5 = vector.extract_strided_slice %1 {offsets = [16, 14], sizes = [8, 1], strides = [1, 1]} : vector<32x16xf32> to vector<8x1xf32>
    %6 = vector.extract_strided_slice %1 {offsets = [24, 0], sizes = [1, 8], strides = [1, 1]} : vector<32x16xf32> to vector<1x8xf32>
    %7 = vector.extract_strided_slice %1 {offsets = [24, 8], sizes = [1, 1], strides = [1, 1]} : vector<32x16xf32> to vector<1x1xf32>
    %cst = arith.constant dense<0.000000e+00> : vector<14x8xf32>
    %8 = tpu.matmul %2, %0, %cst {dimension_numbers = #tpu.dot_dimension_numbers<[1], [1], [0], [0], [0, 0, 1, 0], [], []>, precision = #tpu.contract_precision<fp32>} : vector<14x13xf32>, vector<8x13xf32>, vector<14x8xf32> -> vector<14x8xf32>
    %9 = vector.broadcast %3 : vector<14x1xf32> to vector<14x8xf32>
    %10 = arith.addf %8, %9 : vector<14x8xf32>
    %cst_3 = arith.constant 0.000000e+00 : f32
    %11 = vector.broadcast %cst_3 : f32 to vector<14x8xf32>
    %12 = arith.maximumf %10, %11 : vector<14x8xf32>
    %cst_4 = arith.constant dense<0.000000e+00> : vector<8x8xf32>
    %13 = tpu.matmul %4, %12, %cst_4 {dimension_numbers = #tpu.dot_dimension_numbers<[1], [0], [0], [1], [0, 0, 1, 1], [], []>, precision = #tpu.contract_precision<fp32>} : vector<8x14xf32>, vector<14x8xf32>, vector<8x8xf32> -> vector<8x8xf32>
    %14 = vector.broadcast %5 : vector<8x1xf32> to vector<8x8xf32>
    %15 = arith.addf %13, %14 : vector<8x8xf32>
    %cst_5 = arith.constant 0.000000e+00 : f32
    %16 = vector.broadcast %cst_5 : f32 to vector<8x8xf32>
    %17 = arith.maximumf %15, %16 : vector<8x8xf32>
    %cst_6 = arith.constant dense<0.000000e+00> : vector<1x8xf32>
    %18 = tpu.matmul %6, %17, %cst_6 {dimension_numbers = #tpu.dot_dimension_numbers<[1], [0], [0], [1], [0, 0, 1, 1], [], []>, precision = #tpu.contract_precision<fp32>} : vector<1x8xf32>, vector<8x8xf32>, vector<1x8xf32> -> vector<1x8xf32>
    %19 = vector.broadcast %7 : vector<1x1xf32> to vector<1x8xf32>
    %20 = arith.addf %18, %19 : vector<1x8xf32>
    %21 = arith.negf %20 : vector<1x8xf32>
    %22 = math.exp %21 : vector<1x8xf32>
    %cst_7 = arith.constant 1.000000e+00 : f32
    %23 = vector.broadcast %cst_7 : f32 to vector<1x8xf32>
    %24 = arith.addf %23, %22 : vector<1x8xf32>
    %25 = arith.divf %23, %24 : vector<1x8xf32>
    %c0_8 = arith.constant 0 : index
    %c0_9 = arith.constant 0 : index
    %26 = vector.load %arg3[%c0_8, %c0_9] : memref<1x8xf32, #tpu.memory_space<vmem>>, vector<1x8xf32>
    tpu.vector_store %arg3[%c0_8, %c0_9], %25 {strides = array<i32>} : memref<1x8xf32, #tpu.memory_space<vmem>>, vector<1x8xf32>,
    return
  }
  func.func @transform_0(%arg0: i32) -> (i32, i32) {
    %c0_i32 = arith.constant 0 : i32
    %c0_i32_0 = arith.constant 0 : i32
    return %arg0, %c0_i32 : i32, i32
  }
  func.func @transform_1(%arg0: i32) -> (i32, i32) {
    %c0_i32 = arith.constant 0 : i32
    %c0_i32_0 = arith.constant 0 : i32
    %c0_i32_1 = arith.constant 0 : i32
    return %c0_i32, %c0_i32_0 : i32, i32
  }
  func.func @transform_2(%arg0: i32) -> (i32, i32) {
    %c0_i32 = arith.constant 0 : i32
    %c0_i32_0 = arith.constant 0 : i32
    return %c0_i32, %arg0 : i32, i32
  }
}

</mosaic_0001>

<llo_original>
// kernel: tpu_custom_call.1
$region0: #{tpu_custom_call.1}
  #allocation0 [shape = 'u32[]', space=smem, size = 0x4, offset = 0x4, fixed_abs, tag = 'smem constant byte address 0x4 - core index']
  #allocation1 [shape = 'u32[144,128]{1,0:T(1,128)}', space=vmem, size = 0x12000, scoped, tag = 'internal scratch']
  %s0 = inlined_call_operand.vmem [shape: f32[8,13], index: 0, kind: input, shape index: {}]
  %s1 = inlined_call_operand.vmem [shape: f32[32,16], index: 1, kind: input, shape index: {}]
  %s2 = inlined_call_operand.hbm [shape: f32[1,8], index: 2, kind: output, shape index: {}]
  %s3 = sld [smem:[#allocation0]]
  $region18: #{tpu_custom_call.1} parent=0
    _
  %s5 = ssub.s32 1, %s3
  %s6 = scalar_select 0, %s5, %s3
  $region1: #{tpu_custom_call.1} parent=0
    #allocation2 [shape = 'u8[512]{0}', space=vmem, size = 0x400, scoped, tag = 'output window, operand 0, single buffered']
    #allocation3 [shape = 's32[1]{0}', space=sflag, size = 0x4, scoped, tag = 'scoped memory for tpu_custom_call.1']
    %7 = vsyncpa [#allocation3], 0
    // Predicated region
    $region2: #{tpu_custom_call.1} parent=1 // pred_check
      _
    $region3: #{tpu_custom_call.1} parent=1 // pred_check_branch
      %9 = sbr.rel (0) target = $region5
    $region4: #{tpu_custom_call.1} parent=1 // pred_region
      _
    $region5: #{tpu_custom_call.1} parent=1 // pred_fallthru
      _
    // Predicated region
    $region6: #{tpu_custom_call.1} parent=1 // pred_check
      _
    $region7: #{tpu_custom_call.1} parent=1 // pred_check_branch
      %11 = sbr.rel (0) target = $region9
    $region8: #{tpu_custom_call.1} parent=1 // pred_region
      _
    $region9: #{tpu_custom_call.1} parent=1 // pred_fallthru
      _
    %v12 = vld [vmem:[%s0] sm:$0xff]
    %v13 = vld [vmem:[%s1] sm:$0xff]
    %v14 = vld [vmem:[%s1 + $0x8] sm:$0xff]
    %v15 = vld [vmem:[%s1 + $0x10] sm:$0xff]
    %v16 = vld [vmem:[%s1 + $0x18] sm:$0xff]
    %18 = vset.pattern.permute.xlu0 13
    %19 = vperm.xlu0 %18, %v13
    %v20 = vpop.permute.xlu0 %19
    %23 = vset.pattern.permute.xlu0 13
    %24 = vperm.xlu0 %23, %v14
    %v25 = vpop.permute.xlu0 %24
    %vm27 = vcmask 105472
    %v28 = vsel %vm27, %v13, 0
    %v30 = vsel %vm27, %v14, 0
    %v33 = vsel %vm27, %v12, 0
    %35 = vmatprep.subr.mxu0 0.0
    %36 = vmatpush1.xpose.msra.mxu0 0.0
    %37 = vmatprep.subr.mxu0 0.0
    %38 = vmatpush1.xpose.msra.mxu0 0.0
    %39 = vmatprep.subr.mxu0 0.0
    %40 = vmatpush1.xpose.msra.mxu0 0.0
    %41 = vmatprep.subr.mxu0 0.0
    %42 = vmatpush1.xpose.msra.mxu0 0.0
    %43 = vmatprep.subr.mxu0 0.0
    %44 = vmatpush1.xpose.msra.mxu0 0.0
    %45 = vmatprep.subr.mxu0 0.0
    %46 = vmatpush1.xpose.msra.mxu0 0.0
    %47 = vmatprep.subr.mxu0 0.0
    %48 = vmatpush1.xpose.msra.mxu0 0.0
    %49 = vmatprep.subr.mxu0 0.0
    %50 = vmatpush1.xpose.msra.mxu0 0.0
    %51 = vmatprep.subr.mxu0 0.0
    %52 = vmatpush1.xpose.msra.mxu0 0.0
    %53 = vmatprep.subr.mxu0 0.0
    %54 = vmatpush1.xpose.msra.mxu0 0.0
    %55 = vmatprep.subr.mxu0 0.0
    %56 = vmatpush1.xpose.msra.mxu0 0.0
    %57 = vmatprep.subr.mxu0 0.0
    %58 = vmatpush1.xpose.msra.mxu0 0.0
    %59 = vmatprep.subr.mxu0 0.0
    %60 = vmatpush1.xpose.msra.mxu0 0.0
    %61 = vmatprep.subr.mxu0 0.0
    %62 = vmatpush1.xpose.msra.mxu0 0.0
    %63 = vmatprep.subr.mxu0 0.0
    %64 = vmatpush1.xpose.msra.mxu0 0.0
    %65 = vmatprep.subr.mxu0 0.0
    %v66 = vand.u32 %v33, 4294901760
    %67 = vmatpush1.xpose.msra.mxu0 %v66
    %68 = vmatprep.subr.mxu0 0.0
    %69 = vmatpush2.xpose.msra.mxu0 0.0
    %70 = vmatprep.subr.mxu0 0.0
    %71 = vmatpush2.xpose.msra.mxu0 0.0
    %72 = vmatprep.subr.mxu0 0.0
    %73 = vmatpush2.xpose.msra.mxu0 0.0
    %74 = vmatprep.subr.mxu0 0.0
    %75 = vmatpush2.xpose.msra.mxu0 0.0
    %76 = vmatprep.subr.mxu0 0.0
    %77 = vmatpush2.xpose.msra.mxu0 0.0
    %78 = vmatprep.subr.mxu0 0.0
    %79 = vmatpush2.xpose.msra.mxu0 0.0
    %80 = vmatprep.subr.mxu0 0.0
    %81 = vmatpush2.xpose.msra.mxu0 0.0
    %82 = vmatprep.subr.mxu0 0.0
    %83 = vmatpush2.xpose.msra.mxu0 0.0
    %84 = vmatprep.subr.mxu0 0.0
    %85 = vmatpush2.xpose.msra.mxu0 0.0
    %86 = vmatprep.subr.mxu0 0.0
    %87 = vmatpush2.xpose.msra.mxu0 0.0
    %88 = vmatprep.subr.mxu0 0.0
    %89 = vmatpush2.xpose.msra.mxu0 0.0
    %90 = vmatprep.subr.mxu0 0.0
    %91 = vmatpush2.xpose.msra.mxu0 0.0
    %92 = vmatprep.subr.mxu0 0.0
    %93 = vmatpush2.xpose.msra.mxu0 0.0
    %94 = vmatprep.subr.mxu0 0.0
    %95 = vmatpush2.xpose.msra.mxu0 0.0
    %96 = vmatprep.subr.mxu0 0.0
    %97 = vmatpush2.xpose.msra.mxu0 0.0
    %98 = vmatprep.subr.mxu0 0.0
    %99 = vmatpush2.xpose.msra.mxu0 0.0
    %100 = vmatprep.mubr.f32.mxu0 0.0
    %v101 = vand.u32 %v28, 4294901760
    %v102 = vsub.f32 %v28, %v101
    %v103 = vand.u32 %v102, 4294901760
    %v104 = vsub.f32 %v102, %v103
    %v105 = vand.u32 %v104, 4294901760
    %106 = vmatmul.mubr.f32.gmra.mxu0 %v105
    %v107 = vpop.f32.mrf.mxu0
    %v108 = vadd.f32 %v20, %v107
    %v109 = vpop.f32.mrf.mxu0
    %110 = vmatprep.mubr.f32.mxu0 0.0
    %v111 = vand.u32 %v30, 4294901760
    %v112 = vsub.f32 %v30, %v111
    %v113 = vand.u32 %v112, 4294901760
    %v114 = vsub.f32 %v112, %v113
    %v115 = vand.u32 %v114, 4294901760
    %116 = vmatmul.mubr.f32.gmra.mxu0 %v115
    %v117 = vpop.f32.mrf.mxu0
    %v118 = vadd.f32 %v25, %v117
    %v119 = vpop.f32.mrf.mxu0
    %120 = vdwg.mxu0
    %121 = vmatprep.subr.mxu0 0.0
    %122 = vmatpush1.xpose.msra.mxu0 0.0
    %123 = vmatprep.subr.mxu0 0.0
    %124 = vmatpush1.xpose.msra.mxu0 0.0
    %125 = vmatprep.subr.mxu0 0.0
    %126 = vmatpush1.xpose.msra.mxu0 0.0
    %127 = vmatprep.subr.mxu0 0.0
    %128 = vmatpush1.xpose.msra.mxu0 0.0
    %129 = vmatprep.subr.mxu0 0.0
    %130 = vmatpush1.xpose.msra.mxu0 0.0
    %131 = vmatprep.subr.mxu0 0.0
    %132 = vmatpush1.xpose.msra.mxu0 0.0
    %133 = vmatprep.subr.mxu0 0.0
    %134 = vmatpush1.xpose.msra.mxu0 0.0
    %135 = vmatprep.subr.mxu0 0.0
    %136 = vmatpush1.xpose.msra.mxu0 0.0
    %137 = vmatprep.subr.mxu0 0.0
    %138 = vmatpush1.xpose.msra.mxu0 0.0
    %139 = vmatprep.subr.mxu0 0.0
    %140 = vmatpush1.xpose.msra.mxu0 0.0
    %141 = vmatprep.subr.mxu0 0.0
    %142 = vmatpush1.xpose.msra.mxu0 0.0
    %143 = vmatprep.subr.mxu0 0.0
    %144 = vmatpush1.xpose.msra.mxu0 0.0
    %145 = vmatprep.subr.mxu0 0.0
    %146 = vmatpush1.xpose.msra.mxu0 0.0
    %147 = vmatprep.subr.mxu0 0.0
    %148 = vmatpush1.xpose.msra.mxu0 0.0
    %149 = vmatprep.subr.mxu0 0.0
    %150 = vmatpush1.xpose.msra.mxu0 0.0
    %151 = vmatprep.subr.mxu0 0.0
    %v152 = vand.u32 %v33, 4294901760
    %v153 = vsub.f32 %v33, %v152
    %v154 = vand.u32 %v153, 4294901760
    %v155 = vsub.f32 %v153, %v154
    %v156 = vand.u32 %v155, 4294901760
    %157 = vmatpush1.xpose.msra.mxu0 %v156
    %158 = vmatprep.subr.mxu0 0.0
    %159 = vmatpush2.xpose.msra.mxu0 0.0
    %160 = vmatprep.subr.mxu0 0.0
    %161 = vmatpush2.xpose.msra.mxu0 0.0
    %162 = vmatprep.subr.mxu0 0.0
    %163 = vmatpush2.xpose.msra.mxu0 0.0
    %164 = vmatprep.subr.mxu0 0.0
    %165 = vmatpush2.xpose.msra.mxu0 0.0
    %166 = vmatprep.subr.mxu0 0.0
    %167 = vmatpush2.xpose.msra.mxu0 0.0
    %168 = vmatprep.subr.mxu0 0.0
    %169 = vmatpush2.xpose.msra.mxu0 0.0
    %170 = vmatprep.subr.mxu0 0.0
    %171 = vmatpush2.xpose.msra.mxu0 0.0
    %172 = vmatprep.subr.mxu0 0.0
    %173 = vmatpush2.xpose.msra.mxu0 0.0
    %174 = vmatprep.subr.mxu0 0.0
    %175 = vmatpush2.xpose.msra.mxu0 0.0
    %176 = vmatprep.subr.mxu0 0.0
    %177 = vmatpush2.xpose.msra.mxu0 0.0
    %178 = vmatprep.subr.mxu0 0.0
    %179 = vmatpush2.xpose.msra.mxu0 0.0
    %180 = vmatprep.subr.mxu0 0.0
    %181 = vmatpush2.xpose.msra.mxu0 0.0
    %182 = vmatprep.subr.mxu0 0.0
    %183 = vmatpush2.xpose.msra.mxu0 0.0
    %184 = vmatprep.subr.mxu0 0.0
    %185 = vmatpush2.xpose.msra.mxu0 0.0
    %186 = vmatprep.subr.mxu0 0.0
    %187 = vmatpush2.xpose.msra.mxu0 0.0
    %188 = vmatprep.subr.mxu0 0.0
    %189 = vmatpush2.xpose.msra.mxu0 0.0
    %190 = vmatprep.mubr.f32.mxu0 0.0
    %v191 = vand.u32 %v28, 4294901760
    %192 = vmatmul.mubr.f32.gmra.mxu0 %v191
    %v193 = vpop.f32.mrf.mxu0
    %v194 = vadd.f32 %v108, %v193
    %v195 = vpop.f32.mrf.mxu0
    %196 = vmatprep.mubr.f32.mxu0 0.0
    %v197 = vand.u32 %v30, 4294901760
    %198 = vmatmul.mubr.f32.gmra.mxu0 %v197
    %v199 = vpop.f32.mrf.mxu0
    %v200 = vadd.f32 %v118, %v199
    %v201 = vpop.f32.mrf.mxu0
    %202 = vdwg.mxu0
    %203 = vmatprep.subr.mxu0 0.0
    %204 = vmatpush1.xpose.msra.mxu0 0.0
    %205 = vmatprep.subr.mxu0 0.0
    %206 = vmatpush1.xpose.msra.mxu0 0.0
    %207 = vmatprep.subr.mxu0 0.0
    %208 = vmatpush1.xpose.msra.mxu0 0.0
    %209 = vmatprep.subr.mxu0 0.0
    %210 = vmatpush1.xpose.msra.mxu0 0.0
    %211 = vmatprep.subr.mxu0 0.0
    %212 = vmatpush1.xpose.msra.mxu0 0.0
    %213 = vmatprep.subr.mxu0 0.0
    %214 = vmatpush1.xpose.msra.mxu0 0.0
    %215 = vmatprep.subr.mxu0 0.0
    %216 = vmatpush1.xpose.msra.mxu0 0.0
    %217 = vmatprep.subr.mxu0 0.0
    %218 = vmatpush1.xpose.msra.mxu0 0.0
    %219 = vmatprep.subr.mxu0 0.0
    %220 = vmatpush1.xpose.msra.mxu0 0.0
    %221 = vmatprep.subr.mxu0 0.0
    %222 = vmatpush1.xpose.msra.mxu0 0.0
    %223 = vmatprep.subr.mxu0 0.0
    %224 = vmatpush1.xpose.msra.mxu0 0.0
    %225 = vmatprep.subr.mxu0 0.0
    %226 = vmatpush1.xpose.msra.mxu0 0.0
    %227 = vmatprep.subr.mxu0 0.0
    %228 = vmatpush1.xpose.msra.mxu0 0.0
    %229 = vmatprep.subr.mxu0 0.0
    %230 = vmatpush1.xpose.msra.mxu0 0.0
    %231 = vmatprep.subr.mxu0 0.0
    %232 = vmatpush1.xpose.msra.mxu0 0.0
    %233 = vmatprep.subr.mxu0 0.0
    %v234 = vand.u32 %v33, 4294901760
    %v235 = vsub.f32 %v33, %v234
    %236 = vmatpush1.xpose.msra.mxu0 %v235
    %237 = vmatprep.subr.mxu0 0.0
    %238 = vmatpush2.xpose.msra.mxu0 0.0
    %239 = vmatprep.subr.mxu0 0.0
    %240 = vmatpush2.xpose.msra.mxu0 0.0
    %241 = vmatprep.subr.mxu0 0.0
    %242 = vmatpush2.xpose.msra.mxu0 0.0
    %243 = vmatprep.subr.mxu0 0.0
    %244 = vmatpush2.xpose.msra.mxu0 0.0
    %245 = vmatprep.subr.mxu0 0.0
    %246 = vmatpush2.xpose.msra.mxu0 0.0
    %247 = vmatprep.subr.mxu0 0.0
    %248 = vmatpush2.xpose.msra.mxu0 0.0
    %249 = vmatprep.subr.mxu0 0.0
    %250 = vmatpush2.xpose.msra.mxu0 0.0
    %251 = vmatprep.subr.mxu0 0.0
    %252 = vmatpush2.xpose.msra.mxu0 0.0
    %253 = vmatprep.subr.mxu0 0.0
    %254 = vmatpush2.xpose.msra.mxu0 0.0
    %255 = vmatprep.subr.mxu0 0.0
    %256 = vmatpush2.xpose.msra.mxu0 0.0
    %257 = vmatprep.subr.mxu0 0.0
    %258 = vmatpush2.xpose.msra.mxu0 0.0
    %259 = vmatprep.subr.mxu0 0.0
    %260 = vmatpush2.xpose.msra.mxu0 0.0
    %261 = vmatprep.subr.mxu0 0.0
    %262 = vmatpush2.xpose.msra.mxu0 0.0
    %263 = vmatprep.subr.mxu0 0.0
    %264 = vmatpush2.xpose.msra.mxu0 0.0
    %265 = vmatprep.subr.mxu0 0.0
    %266 = vmatpush2.xpose.msra.mxu0 0.0
    %267 = vmatprep.subr.mxu0 0.0
    %268 = vmatpush2.xpose.msra.mxu0 0.0
    %269 = vmatprep.mubr.f32.mxu0 0.0
    %v270 = vand.u32 %v28, 4294901760
    %v271 = vsub.f32 %v28, %v270
    %272 = vmatmul.mubr.f32.gmra.mxu0 %v271
    %v273 = vpop.f32.mrf.mxu0
    %v274 = vadd.f32 %v194, %v273
    %v275 = vpop.f32.mrf.mxu0
    %276 = vmatprep.mubr.f32.mxu0 0.0
    %v277 = vand.u32 %v30, 4294901760
    %v278 = vsub.f32 %v30, %v277
    %279 = vmatmul.mubr.f32.gmra.mxu0 %v278
    %v280 = vpop.f32.mrf.mxu0
    %v281 = vadd.f32 %v200, %v280
    %v282 = vpop.f32.mrf.mxu0
    %283 = vdwg.mxu0
    %284 = vmatprep.subr.mxu0 0.0
    %285 = vmatpush1.xpose.msra.mxu0 0.0
    %286 = vmatprep.subr.mxu0 0.0
    %287 = vmatpush1.xpose.msra.mxu0 0.0
    %288 = vmatprep.subr.mxu0 0.0
    %289 = vmatpush1.xpose.msra.mxu0 0.0
    %290 = vmatprep.subr.mxu0 0.0
    %291 = vmatpush1.xpose.msra.mxu0 0.0
    %292 = vmatprep.subr.mxu0 0.0
    %293 = vmatpush1.xpose.msra.mxu0 0.0
    %294 = vmatprep.subr.mxu0 0.0
    %295 = vmatpush1.xpose.msra.mxu0 0.0
    %296 = vmatprep.subr.mxu0 0.0
    %297 = vmatpush1.xpose.msra.mxu0 0.0
    %298 = vmatprep.subr.mxu0 0.0
    %299 = vmatpush1.xpose.msra.mxu0 0.0
    %300 = vmatprep.subr.mxu0 0.0
    %301 = vmatpush1.xpose.msra.mxu0 0.0
    %302 = vmatprep.subr.mxu0 0.0
    %303 = vmatpush1.xpose.msra.mxu0 0.0
    %304 = vmatprep.subr.mxu0 0.0
    %305 = vmatpush1.xpose.msra.mxu0 0.0
    %306 = vmatprep.subr.mxu0 0.0
    %307 = vmatpush1.xpose.msra.mxu0 0.0
    %308 = vmatprep.subr.mxu0 0.0
    %309 = vmatpush1.xpose.msra.mxu0 0.0
    %310 = vmatprep.subr.mxu0 0.0
    %311 = vmatpush1.xpose.msra.mxu0 0.0
    %312 = vmatprep.subr.mxu0 0.0
    %313 = vmatpush1.xpose.msra.mxu0 0.0
    %314 = vmatprep.subr.mxu0 0.0
    %v315 = vand.u32 %v33, 4294901760
    %316 = vmatpush1.xpose.msra.mxu0 %v315
    %317 = vmatprep.subr.mxu0 0.0
    %318 = vmatpush2.xpose.msra.mxu0 0.0
    %319 = vmatprep.subr.mxu0 0.0
    %320 = vmatpush2.xpose.msra.mxu0 0.0
    %321 = vmatprep.subr.mxu0 0.0
    %322 = vmatpush2.xpose.msra.mxu0 0.0
    %323 = vmatprep.subr.mxu0 0.0
    %324 = vmatpush2.xpose.msra.mxu0 0.0
    %325 = vmatprep.subr.mxu0 0.0
    %326 = vmatpush2.xpose.msra.mxu0 0.0
    %327 = vmatprep.subr.mxu0 0.0
    %328 = vmatpush2.xpose.msra.mxu0 0.0
    %329 = vmatprep.subr.mxu0 0.0
    %330 = vmatpush2.xpose.msra.mxu0 0.0
    %331 = vmatprep.subr.mxu0 0.0
    %332 = vmatpush2.xpose.msra.mxu0 0.0
    %333 = vmatprep.subr.mxu0 0.0
    %334 = vmatpush2.xpose.msra.mxu0 0.0
    %335 = vmatprep.subr.mxu0 0.0
    %336 = vmatpush2.xpose.msra.mxu0 0.0
    %337 = vmatprep.subr.mxu0 0.0
    %338 = vmatpush2.xpose.msra.mxu0 0.0
    %339 = vmatprep.subr.mxu0 0.0
    %340 = vmatpush2.xpose.msra.mxu0 0.0
    %341 = vmatprep.subr.mxu0 0.0
    %342 = vmatpush2.xpose.msra.mxu0 0.0
    %343 = vmatprep.subr.mxu0 0.0
    %344 = vmatpush2.xpose.msra.mxu0 0.0
    %345 = vmatprep.subr.mxu0 0.0
    %346 = vmatpush2.xpose.msra.mxu0 0.0
    %347 = vmatprep.subr.mxu0 0.0
    %348 = vmatpush2.xpose.msra.mxu0 0.0
    %349 = vmatprep.mubr.f32.mxu0 0.0
    %v350 = vand.u32 %v28, 4294901760
    %v351 = vsub.f32 %v28, %v350
    %v352 = vand.u32 %v351, 4294901760
    %353 = vmatmul.mubr.f32.gmra.mxu0 %v352
    %v354 = vpop.f32.mrf.mxu0
    %v355 = vadd.f32 %v274, %v354
    %v356 = vpop.f32.mrf.mxu0
    %357 = vmatprep.mubr.f32.mxu0 0.0
    %v358 = vand.u32 %v30, 4294901760
    %v359 = vsub.f32 %v30, %v358
    %v360 = vand.u32 %v359, 4294901760
    %361 = vmatmul.mubr.f32.gmra.mxu0 %v360
    %v362 = vpop.f32.mrf.mxu0
    %v363 = vadd.f32 %v281, %v362
    %v364 = vpop.f32.mrf.mxu0
    %365 = vdwg.mxu0
    %366 = vmatprep.subr.mxu0 0.0
    %367 = vmatpush1.xpose.msra.mxu0 0.0
    %368 = vmatprep.subr.mxu0 0.0
    %369 = vmatpush1.xpose.msra.mxu0 0.0
    %370 = vmatprep.subr.mxu0 0.0
    %371 = vmatpush1.xpose.msra.mxu0 0.0
    %372 = vmatprep.subr.mxu0 0.0
    %373 = vmatpush1.xpose.msra.mxu0 0.0
    %374 = vmatprep.subr.mxu0 0.0
    %375 = vmatpush1.xpose.msra.mxu0 0.0
    %376 = vmatprep.subr.mxu0 0.0
    %377 = vmatpush1.xpose.msra.mxu0 0.0
    %378 = vmatprep.subr.mxu0 0.0
    %379 = vmatpush1.xpose.msra.mxu0 0.0
    %380 = vmatprep.subr.mxu0 0.0
    %381 = vmatpush1.xpose.msra.mxu0 0.0
    %382 = vmatprep.subr.mxu0 0.0
    %383 = vmatpush1.xpose.msra.mxu0 0.0
    %384 = vmatprep.subr.mxu0 0.0
    %385 = vmatpush1.xpose.msra.mxu0 0.0
    %386 = vmatprep.subr.mxu0 0.0
    %387 = vmatpush1.xpose.msra.mxu0 0.0
    %388 = vmatprep.subr.mxu0 0.0
    %389 = vmatpush1.xpose.msra.mxu0 0.0
    %390 = vmatprep.subr.mxu0 0.0
    %391 = vmatpush1.xpose.msra.mxu0 0.0
    %392 = vmatprep.subr.mxu0 0.0
    %393 = vmatpush1.xpose.msra.mxu0 0.0
    %394 = vmatprep.subr.mxu0 0.0
    %395 = vmatpush1.xpose.msra.mxu0 0.0
    %396 = vmatprep.subr.mxu0 0.0
    %v397 = vand.u32 %v33, 4294901760
    %v398 = vsub.f32 %v33, %v397
    %v399 = vand.u32 %v398, 4294901760
    %400 = vmatpush1.xpose.msra.mxu0 %v399
    %401 = vmatprep.subr.mxu0 0.0
    %402 = vmatpush2.xpose.msra.mxu0 0.0
    %403 = vmatprep.subr.mxu0 0.0
    %404 = vmatpush2.xpose.msra.mxu0 0.0
    %405 = vmatprep.subr.mxu0 0.0
    %406 = vmatpush2.xpose.msra.mxu0 0.0
    %407 = vmatprep.subr.mxu0 0.0
    %408 = vmatpush2.xpose.msra.mxu0 0.0
    %409 = vmatprep.subr.mxu0 0.0
    %410 = vmatpush2.xpose.msra.mxu0 0.0
    %411 = vmatprep.subr.mxu0 0.0
    %412 = vmatpush2.xpose.msra.mxu0 0.0
    %413 = vmatprep.subr.mxu0 0.0
    %414 = vmatpush2.xpose.msra.mxu0 0.0
    %415 = vmatprep.subr.mxu0 0.0
    %416 = vmatpush2.xpose.msra.mxu0 0.0
    %417 = vmatprep.subr.mxu0 0.0
    %418 = vmatpush2.xpose.msra.mxu0 0.0
    %419 = vmatprep.subr.mxu0 0.0
    %420 = vmatpush2.xpose.msra.mxu0 0.0
    %421 = vmatprep.subr.mxu0 0.0
    %422 = vmatpush2.xpose.msra.mxu0 0.0
    %423 = vmatprep.subr.mxu0 0.0
    %424 = vmatpush2.xpose.msra.mxu0 0.0
    %425 = vmatprep.subr.mxu0 0.0
    %426 = vmatpush2.xpose.msra.mxu0 0.0
    %427 = vmatprep.subr.mxu0 0.0
    %428 = vmatpush2.xpose.msra.mxu0 0.0
    %429 = vmatprep.subr.mxu0 0.0
    %430 = vmatpush2.xpose.msra.mxu0 0.0
    %431 = vmatprep.subr.mxu0 0.0
    %432 = vmatpush2.xpose.msra.mxu0 0.0
    %433 = vmatprep.mubr.f32.mxu0 0.0
    %v434 = vand.u32 %v28, 4294901760
    %435 = vmatmul.mubr.f32.gmra.mxu0 %v434
    %v436 = vpop.f32.mrf.mxu0
    %v437 = vadd.f32 %v355, %v436
    %v438 = vpop.f32.mrf.mxu0
    %439 = vmatprep.mubr.f32.mxu0 0.0
    %v440 = vand.u32 %v30, 4294901760
    %441 = vmatmul.mubr.f32.gmra.mxu0 %v440
    %v442 = vpop.f32.mrf.mxu0
    %v443 = vadd.f32 %v363, %v442
    %v444 = vpop.f32.mrf.mxu0
    %445 = vdwg.mxu0
    %446 = vmatprep.subr.mxu0 0.0
    %447 = vmatpush1.xpose.msra.mxu0 0.0
    %448 = vmatprep.subr.mxu0 0.0
    %449 = vmatpush1.xpose.msra.mxu0 0.0
    %450 = vmatprep.subr.mxu0 0.0
    %451 = vmatpush1.xpose.msra.mxu0 0.0
    %452 = vmatprep.subr.mxu0 0.0
    %453 = vmatpush1.xpose.msra.mxu0 0.0
    %454 = vmatprep.subr.mxu0 0.0
    %455 = vmatpush1.xpose.msra.mxu0 0.0
    %456 = vmatprep.subr.mxu0 0.0
    %457 = vmatpush1.xpose.msra.mxu0 0.0
    %458 = vmatprep.subr.mxu0 0.0
    %459 = vmatpush1.xpose.msra.mxu0 0.0
    %460 = vmatprep.subr.mxu0 0.0
    %461 = vmatpush1.xpose.msra.mxu0 0.0
    %462 = vmatprep.subr.mxu0 0.0
    %463 = vmatpush1.xpose.msra.mxu0 0.0
    %464 = vmatprep.subr.mxu0 0.0
    %465 = vmatpush1.xpose.msra.mxu0 0.0
    %466 = vmatprep.subr.mxu0 0.0
    %467 = vmatpush1.xpose.msra.mxu0 0.0
    %468 = vmatprep.subr.mxu0 0.0
    %469 = vmatpush1.xpose.msra.mxu0 0.0
    %470 = vmatprep.subr.mxu0 0.0
    %471 = vmatpush1.xpose.msra.mxu0 0.0
    %472 = vmatprep.subr.mxu0 0.0
    %473 = vmatpush1.xpose.msra.mxu0 0.0
    %474 = vmatprep.subr.mxu0 0.0
    %475 = vmatpush1.xpose.msra.mxu0 0.0
    %476 = vmatprep.subr.mxu0 0.0
    %v477 = vand.u32 %v33, 4294901760
    %478 = vmatpush1.xpose.msra.mxu0 %v477
    %479 = vmatprep.subr.mxu0 0.0
    %480 = vmatpush2.xpose.msra.mxu0 0.0
    %481 = vmatprep.subr.mxu0 0.0
    %482 = vmatpush2.xpose.msra.mxu0 0.0
    %483 = vmatprep.subr.mxu0 0.0
    %484 = vmatpush2.xpose.msra.mxu0 0.0
    %485 = vmatprep.subr.mxu0 0.0
    %486 = vmatpush2.xpose.msra.mxu0 0.0
    %487 = vmatprep.subr.mxu0 0.0
    %488 = vmatpush2.xpose.msra.mxu0 0.0
    %489 = vmatprep.subr.mxu0 0.0
    %490 = vmatpush2.xpose.msra.mxu0 0.0
    %491 = vmatprep.subr.mxu0 0.0
    %492 = vmatpush2.xpose.msra.mxu0 0.0
    %493 = vmatprep.subr.mxu0 0.0
    %494 = vmatpush2.xpose.msra.mxu0 0.0
    %495 = vmatprep.subr.mxu0 0.0
    %496 = vmatpush2.xpose.msra.mxu0 0.0
    %497 = vmatprep.subr.mxu0 0.0
    %498 = vmatpush2.xpose.msra.mxu0 0.0
    %499 = vmatprep.subr.mxu0 0.0
    %500 = vmatpush2.xpose.msra.mxu0 0.0
    %501 = vmatprep.subr.mxu0 0.0
    %502 = vmatpush2.xpose.msra.mxu0 0.0
    %503 = vmatprep.subr.mxu0 0.0
    %504 = vmatpush2.xpose.msra.mxu0 0.0
    %505 = vmatprep.subr.mxu0 0.0
    %506 = vmatpush2.xpose.msra.mxu0 0.0
    %507 = vmatprep.subr.mxu0 0.0
    %508 = vmatpush2.xpose.msra.mxu0 0.0
    %509 = vmatprep.subr.mxu0 0.0
    %510 = vmatpush2.xpose.msra.mxu0 0.0
    %511 = vmatprep.mubr.f32.mxu0 0.0
    %v512 = vand.u32 %v28, 4294901760
    %513 = vmatmul.mubr.f32.gmra.mxu0 %v512
    %v514 = vpop.f32.mrf.mxu0
    %v515 = vadd.f32 %v437, %v514
    %v516 = vpop.f32.mrf.mxu0
    %517 = vmatprep.mubr.f32.mxu0 0.0
    %v518 = vand.u32 %v30, 4294901760
    %519 = vmatmul.mubr.f32.gmra.mxu0 %v518
    %v520 = vpop.f32.mrf.mxu0
    %v521 = vadd.f32 %v443, %v520
    %v522 = vpop.f32.mrf.mxu0
    %523 = vdwg.mxu0
    %v524 = vmax.f32 %v515, 0.0
    %v525 = vmax.f32 %v521, 0.0
    %527 = vset.pattern.permute.xlu0 14
    %528 = vperm.xlu0 %527, %v15
    %v529 = vpop.permute.xlu0 %528
    %vm531 = vcmask 113664
    %v532 = vsel %vm531, %v15, 0
    %vm534 = vcmask 1045504
    %v536 = vsel %vm534, %v525, 0
    %538 = vmatprep.subr.mxu0 0.0
    %539 = vmatpush1.msra.mxu0 0.0
    %540 = vmatprep.subr.mxu0 0.0
    %541 = vmatpush1.msra.mxu0 0.0
    %542 = vmatprep.subr.mxu0 0.0
    %543 = vmatpush1.msra.mxu0 0.0
    %544 = vmatprep.subr.mxu0 0.0
    %545 = vmatpush1.msra.mxu0 0.0
    %546 = vmatprep.subr.mxu0 0.0
    %547 = vmatpush1.msra.mxu0 0.0
    %548 = vmatprep.subr.mxu0 0.0
    %549 = vmatpush1.msra.mxu0 0.0
    %550 = vmatprep.subr.mxu0 0.0
    %551 = vmatpush1.msra.mxu0 0.0
    %552 = vmatprep.subr.mxu0 0.0
    %553 = vmatpush1.msra.mxu0 0.0
    %554 = vmatprep.subr.mxu0 0.0
    %555 = vmatpush1.msra.mxu0 0.0
    %556 = vmatprep.subr.mxu0 0.0
    %557 = vmatpush1.msra.mxu0 0.0
    %558 = vmatprep.subr.mxu0 0.0
    %559 = vmatpush1.msra.mxu0 0.0
    %560 = vmatprep.subr.mxu0 0.0
    %561 = vmatpush1.msra.mxu0 0.0
    %562 = vmatprep.subr.mxu0 0.0
    %563 = vmatpush1.msra.mxu0 0.0
    %564 = vmatprep.subr.mxu0 0.0
    %565 = vmatpush1.msra.mxu0 0.0
    %566 = vmatprep.subr.mxu0 0.0
    %v567 = vand.u32 %v536, 4294901760
    %568 = vmatpush1.msra.mxu0 %v567
    %569 = vmatprep.subr.mxu0 0.0
    %v570 = vand.u32 %v524, 4294901760
    %571 = vmatpush1.msra.mxu0 %v570
    %572 = vmatprep.subr.mxu0 0.0
    %573 = vmatpush2.msra.mxu0 0.0
    %574 = vmatprep.subr.mxu0 0.0
    %575 = vmatpush2.msra.mxu0 0.0
    %576 = vmatprep.subr.mxu0 0.0
    %577 = vmatpush2.msra.mxu0 0.0
    %578 = vmatprep.subr.mxu0 0.0
    %579 = vmatpush2.msra.mxu0 0.0
    %580 = vmatprep.subr.mxu0 0.0
    %581 = vmatpush2.msra.mxu0 0.0
    %582 = vmatprep.subr.mxu0 0.0
    %583 = vmatpush2.msra.mxu0 0.0
    %584 = vmatprep.subr.mxu0 0.0
    %585 = vmatpush2.msra.mxu0 0.0
    %586 = vmatprep.subr.mxu0 0.0
    %587 = vmatpush2.msra.mxu0 0.0
    %588 = vmatprep.subr.mxu0 0.0
    %589 = vmatpush2.msra.mxu0 0.0
    %590 = vmatprep.subr.mxu0 0.0
    %591 = vmatpush2.msra.mxu0 0.0
    %592 = vmatprep.subr.mxu0 0.0
    %593 = vmatpush2.msra.mxu0 0.0
    %594 = vmatprep.subr.mxu0 0.0
    %595 = vmatpush2.msra.mxu0 0.0
    %596 = vmatprep.subr.mxu0 0.0
    %597 = vmatpush2.msra.mxu0 0.0
    %598 = vmatprep.subr.mxu0 0.0
    %599 = vmatpush2.msra.mxu0 0.0
    %600 = vmatprep.subr.mxu0 0.0
    %601 = vmatpush2.msra.mxu0 0.0
    %602 = vmatprep.subr.mxu0 0.0
    %603 = vmatpush2.msra.mxu0 0.0
    %604 = vmatprep.mubr.f32.mxu0 0.0
    %v605 = vand.u32 %v532, 4294901760
    %v606 = vsub.f32 %v532, %v605
    %v607 = vand.u32 %v606, 4294901760
    %v608 = vsub.f32 %v606, %v607
    %v609 = vand.u32 %v608, 4294901760
    %610 = vmatmul.mubr.f32.gmra.mxu0 %v609
    %v611 = vpop.f32.mrf.mxu0
    %v612 = vadd.f32 %v529, %v611
    %v613 = vpop.f32.mrf.mxu0
    %614 = vdwg.mxu0
    %615 = vmatprep.subr.mxu0 0.0
    %616 = vmatpush1.msra.mxu0 0.0
    %617 = vmatprep.subr.mxu0 0.0
    %618 = vmatpush1.msra.mxu0 0.0
    %619 = vmatprep.subr.mxu0 0.0
    %620 = vmatpush1.msra.mxu0 0.0
    %621 = vmatprep.subr.mxu0 0.0
    %622 = vmatpush1.msra.mxu0 0.0
    %623 = vmatprep.subr.mxu0 0.0
    %624 = vmatpush1.msra.mxu0 0.0
    %625 = vmatprep.subr.mxu0 0.0
    %626 = vmatpush1.msra.mxu0 0.0
    %627 = vmatprep.subr.mxu0 0.0
    %628 = vmatpush1.msra.mxu0 0.0
    %629 = vmatprep.subr.mxu0 0.0
    %630 = vmatpush1.msra.mxu0 0.0
    %631 = vmatprep.subr.mxu0 0.0
    %632 = vmatpush1.msra.mxu0 0.0
    %633 = vmatprep.subr.mxu0 0.0
    %634 = vmatpush1.msra.mxu0 0.0
    %635 = vmatprep.subr.mxu0 0.0
    %636 = vmatpush1.msra.mxu0 0.0
    %637 = vmatprep.subr.mxu0 0.0
    %638 = vmatpush1.msra.mxu0 0.0
    %639 = vmatprep.subr.mxu0 0.0
    %640 = vmatpush1.msra.mxu0 0.0
    %641 = vmatprep.subr.mxu0 0.0
    %642 = vmatpush1.msra.mxu0 0.0
    %643 = vmatprep.subr.mxu0 0.0
    %v644 = vand.u32 %v536, 4294901760
    %v645 = vsub.f32 %v536, %v644
    %v646 = vand.u32 %v645, 4294901760
    %v647 = vsub.f32 %v645, %v646
    %v648 = vand.u32 %v647, 4294901760
    %649 = vmatpush1.msra.mxu0 %v648
    %650 = vmatprep.subr.mxu0 0.0
    %v651 = vand.u32 %v524, 4294901760
    %v652 = vsub.f32 %v524, %v651
    %v653 = vand.u32 %v652, 4294901760
    %v654 = vsub.f32 %v652, %v653
    %v655 = vand.u32 %v654, 4294901760
    %656 = vmatpush1.msra.mxu0 %v655
    %657 = vmatprep.subr.mxu0 0.0
    %658 = vmatpush2.msra.mxu0 0.0
    %659 = vmatprep.subr.mxu0 0.0
    %660 = vmatpush2.msra.mxu0 0.0
    %661 = vmatprep.subr.mxu0 0.0
    %662 = vmatpush2.msra.mxu0 0.0
    %663 = vmatprep.subr.mxu0 0.0
    %664 = vmatpush2.msra.mxu0 0.0
    %665 = vmatprep.subr.mxu0 0.0
    %666 = vmatpush2.msra.mxu0 0.0
    %667 = vmatprep.subr.mxu0 0.0
    %668 = vmatpush2.msra.mxu0 0.0
    %669 = vmatprep.subr.mxu0 0.0
    %670 = vmatpush2.msra.mxu0 0.0
    %671 = vmatprep.subr.mxu0 0.0
    %672 = vmatpush2.msra.mxu0 0.0
    %673 = vmatprep.subr.mxu0 0.0
    %674 = vmatpush2.msra.mxu0 0.0
    %675 = vmatprep.subr.mxu0 0.0
    %676 = vmatpush2.msra.mxu0 0.0
    %677 = vmatprep.subr.mxu0 0.0
    %678 = vmatpush2.msra.mxu0 0.0
    %679 = vmatprep.subr.mxu0 0.0
    %680 = vmatpush2.msra.mxu0 0.0
    %681 = vmatprep.subr.mxu0 0.0
    %682 = vmatpush2.msra.mxu0 0.0
    %683 = vmatprep.subr.mxu0 0.0
    %684 = vmatpush2.msra.mxu0 0.0
    %685 = vmatprep.subr.mxu0 0.0
    %686 = vmatpush2.msra.mxu0 0.0
    %687 = vmatprep.subr.mxu0 0.0
    %688 = vmatpush2.msra.mxu0 0.0
    %689 = vmatprep.mubr.f32.mxu0 0.0
    %v690 = vand.u32 %v532, 4294901760
    %691 = vmatmul.mubr.f32.gmra.mxu0 %v690
    %v692 = vpop.f32.mrf.mxu0
    %v693 = vadd.f32 %v612, %v692
    %v694 = vpop.f32.mrf.mxu0
    %695 = vdwg.mxu0
    %696 = vmatprep.subr.mxu0 0.0
    %697 = vmatpush1.msra.mxu0 0.0
    %698 = vmatprep.subr.mxu0 0.0
    %699 = vmatpush1.msra.mxu0 0.0
    %700 = vmatprep.subr.mxu0 0.0
    %701 = vmatpush1.msra.mxu0 0.0
    %702 = vmatprep.subr.mxu0 0.0
    %703 = vmatpush1.msra.mxu0 0.0
    %704 = vmatprep.subr.mxu0 0.0
    %705 = vmatpush1.msra.mxu0 0.0
    %706 = vmatprep.subr.mxu0 0.0
    %707 = vmatpush1.msra.mxu0 0.0
    %708 = vmatprep.subr.mxu0 0.0
    %709 = vmatpush1.msra.mxu0 0.0
    %710 = vmatprep.subr.mxu0 0.0
    %711 = vmatpush1.msra.mxu0 0.0
    %712 = vmatprep.subr.mxu0 0.0
    %713 = vmatpush1.msra.mxu0 0.0
    %714 = vmatprep.subr.mxu0 0.0
    %715 = vmatpush1.msra.mxu0 0.0
    %716 = vmatprep.subr.mxu0 0.0
    %717 = vmatpush1.msra.mxu0 0.0
    %718 = vmatprep.subr.mxu0 0.0
    %719 = vmatpush1.msra.mxu0 0.0
    %720 = vmatprep.subr.mxu0 0.0
    %721 = vmatpush1.msra.mxu0 0.0
    %722 = vmatprep.subr.mxu0 0.0
    %723 = vmatpush1.msra.mxu0 0.0
    %724 = vmatprep.subr.mxu0 0.0
    %v725 = vand.u32 %v536, 4294901760
    %v726 = vsub.f32 %v536, %v725
    %727 = vmatpush1.msra.mxu0 %v726
    %728 = vmatprep.subr.mxu0 0.0
    %v729 = vand.u32 %v524, 4294901760
    %v730 = vsub.f32 %v524, %v729
    %731 = vmatpush1.msra.mxu0 %v730
    %732 = vmatprep.subr.mxu0 0.0
    %733 = vmatpush2.msra.mxu0 0.0
    %734 = vmatprep.subr.mxu0 0.0
    %735 = vmatpush2.msra.mxu0 0.0
    %736 = vmatprep.subr.mxu0 0.0
    %737 = vmatpush2.msra.mxu0 0.0
    %738 = vmatprep.subr.mxu0 0.0
    %739 = vmatpush2.msra.mxu0 0.0
    %740 = vmatprep.subr.mxu0 0.0
    %741 = vmatpush2.msra.mxu0 0.0
    %742 = vmatprep.subr.mxu0 0.0
    %743 = vmatpush2.msra.mxu0 0.0
    %744 = vmatprep.subr.mxu0 0.0
    %745 = vmatpush2.msra.mxu0 0.0
    %746 = vmatprep.subr.mxu0 0.0
    %747 = vmatpush2.msra.mxu0 0.0
    %748 = vmatprep.subr.mxu0 0.0
    %749 = vmatpush2.msra.mxu0 0.0
    %750 = vmatprep.subr.mxu0 0.0
    %751 = vmatpush2.msra.mxu0 0.0
    %752 = vmatprep.subr.mxu0 0.0
    %753 = vmatpush2.msra.mxu0 0.0
    %754 = vmatprep.subr.mxu0 0.0
    %755 = vmatpush2.msra.mxu0 0.0
    %756 = vmatprep.subr.mxu0 0.0
    %757 = vmatpush2.msra.mxu0 0.0
    %758 = vmatprep.subr.mxu0 0.0
    %759 = vmatpush2.msra.mxu0 0.0
    %760 = vmatprep.subr.mxu0 0.0
    %761 = vmatpush2.msra.mxu0 0.0
    %762 = vmatprep.subr.mxu0 0.0
    %763 = vmatpush2.msra.mxu0 0.0
    %764 = vmatprep.mubr.f32.mxu0 0.0
    %v765 = vand.u32 %v532, 4294901760
    %v766 = vsub.f32 %v532, %v765
    %767 = vmatmul.mubr.f32.gmra.mxu0 %v766
    %v768 = vpop.f32.mrf.mxu0
    %v769 = vadd.f32 %v693, %v768
    %v770 = vpop.f32.mrf.mxu0
    %771 = vdwg.mxu0
    %772 = vmatprep.subr.mxu0 0.0
    %773 = vmatpush1.msra.mxu0 0.0
    %774 = vmatprep.subr.mxu0 0.0
    %775 = vmatpush1.msra.mxu0 0.0
    %776 = vmatprep.subr.mxu0 0.0
    %777 = vmatpush1.msra.mxu0 0.0
    %778 = vmatprep.subr.mxu0 0.0
    %779 = vmatpush1.msra.mxu0 0.0
    %780 = vmatprep.subr.mxu0 0.0
    %781 = vmatpush1.msra.mxu0 0.0
    %782 = vmatprep.subr.mxu0 0.0
    %783 = vmatpush1.msra.mxu0 0.0
    %784 = vmatprep.subr.mxu0 0.0
    %785 = vmatpush1.msra.mxu0 0.0
    %786 = vmatprep.subr.mxu0 0.0
    %787 = vmatpush1.msra.mxu0 0.0
    %788 = vmatprep.subr.mxu0 0.0
    %789 = vmatpush1.msra.mxu0 0.0
    %790 = vmatprep.subr.mxu0 0.0
    %791 = vmatpush1.msra.mxu0 0.0
    %792 = vmatprep.subr.mxu0 0.0
    %793 = vmatpush1.msra.mxu0 0.0
    %794 = vmatprep.subr.mxu0 0.0
    %795 = vmatpush1.msra.mxu0 0.0
    %796 = vmatprep.subr.mxu0 0.0
    %797 = vmatpush1.msra.mxu0 0.0
    %798 = vmatprep.subr.mxu0 0.0
    %799 = vmatpush1.msra.mxu0 0.0
    %800 = vmatprep.subr.mxu0 0.0
    %v801 = vand.u32 %v536, 4294901760
    %802 = vmatpush1.msra.mxu0 %v801
    %803 = vmatprep.subr.mxu0 0.0
    %v804 = vand.u32 %v524, 4294901760
    %805 = vmatpush1.msra.mxu0 %v804
    %806 = vmatprep.subr.mxu0 0.0
    %807 = vmatpush2.msra.mxu0 0.0
    %808 = vmatprep.subr.mxu0 0.0
    %809 = vmatpush2.msra.mxu0 0.0
    %810 = vmatprep.subr.mxu0 0.0
    %811 = vmatpush2.msra.mxu0 0.0
    %812 = vmatprep.subr.mxu0 0.0
    %813 = vmatpush2.msra.mxu0 0.0
    %814 = vmatprep.subr.mxu0 0.0
    %815 = vmatpush2.msra.mxu0 0.0
    %816 = vmatprep.subr.mxu0 0.0
    %817 = vmatpush2.msra.mxu0 0.0
    %818 = vmatprep.subr.mxu0 0.0
    %819 = vmatpush2.msra.mxu0 0.0
    %820 = vmatprep.subr.mxu0 0.0
    %821 = vmatpush2.msra.mxu0 0.0
    %822 = vmatprep.subr.mxu0 0.0
    %823 = vmatpush2.msra.mxu0 0.0
    %824 = vmatprep.subr.mxu0 0.0
    %825 = vmatpush2.msra.mxu0 0.0
    %826 = vmatprep.subr.mxu0 0.0
    %827 = vmatpush2.msra.mxu0 0.0
    %828 = vmatprep.subr.mxu0 0.0
    %829 = vmatpush2.msra.mxu0 0.0
    %830 = vmatprep.subr.mxu0 0.0
    %831 = vmatpush2.msra.mxu0 0.0
    %832 = vmatprep.subr.mxu0 0.0
    %833 = vmatpush2.msra.mxu0 0.0
    %834 = vmatprep.subr.mxu0 0.0
    %835 = vmatpush2.msra.mxu0 0.0
    %836 = vmatprep.subr.mxu0 0.0
    %837 = vmatpush2.msra.mxu0 0.0
    %838 = vmatprep.mubr.f32.mxu0 0.0
    %v839 = vand.u32 %v532, 4294901760
    %v840 = vsub.f32 %v532, %v839
    %v841 = vand.u32 %v840, 4294901760
    %842 = vmatmul.mubr.f32.gmra.mxu0 %v841
    %v843 = vpop.f32.mrf.mxu0
    %v844 = vadd.f32 %v769, %v843
    %v845 = vpop.f32.mrf.mxu0
    %846 = vdwg.mxu0
    %847 = vmatprep.subr.mxu0 0.0
    %848 = vmatpush1.msra.mxu0 0.0
    %849 = vmatprep.subr.mxu0 0.0
    %850 = vmatpush1.msra.mxu0 0.0
    %851 = vmatprep.subr.mxu0 0.0
    %852 = vmatpush1.msra.mxu0 0.0
    %853 = vmatprep.subr.mxu0 0.0
    %854 = vmatpush1.msra.mxu0 0.0
    %855 = vmatprep.subr.mxu0 0.0
    %856 = vmatpush1.msra.mxu0 0.0
    %857 = vmatprep.subr.mxu0 0.0
    %858 = vmatpush1.msra.mxu0 0.0
    %859 = vmatprep.subr.mxu0 0.0
    %860 = vmatpush1.msra.mxu0 0.0
    %861 = vmatprep.subr.mxu0 0.0
    %862 = vmatpush1.msra.mxu0 0.0
    %863 = vmatprep.subr.mxu0 0.0
    %864 = vmatpush1.msra.mxu0 0.0
    %865 = vmatprep.subr.mxu0 0.0
    %866 = vmatpush1.msra.mxu0 0.0
    %867 = vmatprep.subr.mxu0 0.0
    %868 = vmatpush1.msra.mxu0 0.0
    %869 = vmatprep.subr.mxu0 0.0
    %870 = vmatpush1.msra.mxu0 0.0
    %871 = vmatprep.subr.mxu0 0.0
    %872 = vmatpush1.msra.mxu0 0.0
    %873 = vmatprep.subr.mxu0 0.0
    %874 = vmatpush1.msra.mxu0 0.0
    %875 = vmatprep.subr.mxu0 0.0
    %v876 = vand.u32 %v536, 4294901760
    %v877 = vsub.f32 %v536, %v876
    %v878 = vand.u32 %v877, 4294901760
    %879 = vmatpush1.msra.mxu0 %v878
    %880 = vmatprep.subr.mxu0 0.0
    %v881 = vand.u32 %v524, 4294901760
    %v882 = vsub.f32 %v524, %v881
    %v883 = vand.u32 %v882, 4294901760
    %884 = vmatpush1.msra.mxu0 %v883
    %885 = vmatprep.subr.mxu0 0.0
    %886 = vmatpush2.msra.mxu0 0.0
    %887 = vmatprep.subr.mxu0 0.0
    %888 = vmatpush2.msra.mxu0 0.0
    %889 = vmatprep.subr.mxu0 0.0
    %890 = vmatpush2.msra.mxu0 0.0
    %891 = vmatprep.subr.mxu0 0.0
    %892 = vmatpush2.msra.mxu0 0.0
    %893 = vmatprep.subr.mxu0 0.0
    %894 = vmatpush2.msra.mxu0 0.0
    %895 = vmatprep.subr.mxu0 0.0
    %896 = vmatpush2.msra.mxu0 0.0
    %897 = vmatprep.subr.mxu0 0.0
    %898 = vmatpush2.msra.mxu0 0.0
    %899 = vmatprep.subr.mxu0 0.0
    %900 = vmatpush2.msra.mxu0 0.0
    %901 = vmatprep.subr.mxu0 0.0
    %902 = vmatpush2.msra.mxu0 0.0
    %903 = vmatprep.subr.mxu0 0.0
    %904 = vmatpush2.msra.mxu0 0.0
    %905 = vmatprep.subr.mxu0 0.0
    %906 = vmatpush2.msra.mxu0 0.0
    %907 = vmatprep.subr.mxu0 0.0
    %908 = vmatpush2.msra.mxu0 0.0
    %909 = vmatprep.subr.mxu0 0.0
    %910 = vmatpush2.msra.mxu0 0.0
    %911 = vmatprep.subr.mxu0 0.0
    %912 = vmatpush2.msra.mxu0 0.0
    %913 = vmatprep.subr.mxu0 0.0
    %914 = vmatpush2.msra.mxu0 0.0
    %915 = vmatprep.subr.mxu0 0.0
    %916 = vmatpush2.msra.mxu0 0.0
    %917 = vmatprep.mubr.f32.mxu0 0.0
    %v918 = vand.u32 %v532, 4294901760
    %919 = vmatmul.mubr.f32.gmra.mxu0 %v918
    %v920 = vpop.f32.mrf.mxu0
    %v921 = vadd.f32 %v844, %v920
    %v922 = vpop.f32.mrf.mxu0
    %923 = vdwg.mxu0
    %924 = vmatprep.subr.mxu0 0.0
    %925 = vmatpush1.msra.mxu0 0.0
    %926 = vmatprep.subr.mxu0 0.0
    %927 = vmatpush1.msra.mxu0 0.0
    %928 = vmatprep.subr.mxu0 0.0
    %929 = vmatpush1.msra.mxu0 0.0
    %930 = vmatprep.subr.mxu0 0.0
    %931 = vmatpush1.msra.mxu0 0.0
    %932 = vmatprep.subr.mxu0 0.0
    %933 = vmatpush1.msra.mxu0 0.0
    %934 = vmatprep.subr.mxu0 0.0
    %935 = vmatpush1.msra.mxu0 0.0
    %936 = vmatprep.subr.mxu0 0.0
    %937 = vmatpush1.msra.mxu0 0.0
    %938 = vmatprep.subr.mxu0 0.0
    %939 = vmatpush1.msra.mxu0 0.0
    %940 = vmatprep.subr.mxu0 0.0
    %941 = vmatpush1.msra.mxu0 0.0
    %942 = vmatprep.subr.mxu0 0.0
    %943 = vmatpush1.msra.mxu0 0.0
    %944 = vmatprep.subr.mxu0 0.0
    %945 = vmatpush1.msra.mxu0 0.0
    %946 = vmatprep.subr.mxu0 0.0
    %947 = vmatpush1.msra.mxu0 0.0
    %948 = vmatprep.subr.mxu0 0.0
    %949 = vmatpush1.msra.mxu0 0.0
    %950 = vmatprep.subr.mxu0 0.0
    %951 = vmatpush1.msra.mxu0 0.0
    %952 = vmatprep.subr.mxu0 0.0
    %v953 = vand.u32 %v536, 4294901760
    %954 = vmatpush1.msra.mxu0 %v953
    %955 = vmatprep.subr.mxu0 0.0
    %v956 = vand.u32 %v524, 4294901760
    %957 = vmatpush1.msra.mxu0 %v956
    %958 = vmatprep.subr.mxu0 0.0
    %959 = vmatpush2.msra.mxu0 0.0
    %960 = vmatprep.subr.mxu0 0.0
    %961 = vmatpush2.msra.mxu0 0.0
    %962 = vmatprep.subr.mxu0 0.0
    %963 = vmatpush2.msra.mxu0 0.0
    %964 = vmatprep.subr.mxu0 0.0
    %965 = vmatpush2.msra.mxu0 0.0
    %966 = vmatprep.subr.mxu0 0.0
    %967 = vmatpush2.msra.mxu0 0.0
    %968 = vmatprep.subr.mxu0 0.0
    %969 = vmatpush2.msra.mxu0 0.0
    %970 = vmatprep.subr.mxu0 0.0
    %971 = vmatpush2.msra.mxu0 0.0
    %972 = vmatprep.subr.mxu0 0.0
    %973 = vmatpush2.msra.mxu0 0.0
    %974 = vmatprep.subr.mxu0 0.0
    %975 = vmatpush2.msra.mxu0 0.0
    %976 = vmatprep.subr.mxu0 0.0
    %977 = vmatpush2.msra.mxu0 0.0
    %978 = vmatprep.subr.mxu0 0.0
    %979 = vmatpush2.msra.mxu0 0.0
    %980 = vmatprep.subr.mxu0 0.0
    %981 = vmatpush2.msra.mxu0 0.0
    %982 = vmatprep.subr.mxu0 0.0
    %983 = vmatpush2.msra.mxu0 0.0
    %984 = vmatprep.subr.mxu0 0.0
    %985 = vmatpush2.msra.mxu0 0.0
    %986 = vmatprep.subr.mxu0 0.0
    %987 = vmatpush2.msra.mxu0 0.0
    %988 = vmatprep.subr.mxu0 0.0
    %989 = vmatpush2.msra.mxu0 0.0
    %990 = vmatprep.mubr.f32.mxu0 0.0
    %v991 = vand.u32 %v532, 4294901760
    %992 = vmatmul.mubr.f32.gmra.mxu0 %v991
    %v993 = vpop.f32.mrf.mxu0
    %v994 = vadd.f32 %v921, %v993
    %v995 = vpop.f32.mrf.mxu0
    %996 = vdwg.mxu0
    %v997 = vmax.f32 %v994, 0.0
    %999 = vset.pattern.permute.xlu0 8
    %1000 = vperm.xlu0 %999, %v16
    %v1001 = vpop.permute.xlu0 %1000
    %vm1003 = vcmask 64512
    %v1004 = vsel %vm1003, %v16, 0
    %1006 = vmatprep.subr.mxu0 0.0
    %1007 = vmatpush1.msra.mxu0 0.0
    %1008 = vmatprep.subr.mxu0 0.0
    %1009 = vmatpush1.msra.mxu0 0.0
    %1010 = vmatprep.subr.mxu0 0.0
    %1011 = vmatpush1.msra.mxu0 0.0
    %1012 = vmatprep.subr.mxu0 0.0
    %1013 = vmatpush1.msra.mxu0 0.0
    %1014 = vmatprep.subr.mxu0 0.0
    %1015 = vmatpush1.msra.mxu0 0.0
    %1016 = vmatprep.subr.mxu0 0.0
    %1017 = vmatpush1.msra.mxu0 0.0
    %1018 = vmatprep.subr.mxu0 0.0
    %1019 = vmatpush1.msra.mxu0 0.0
    %1020 = vmatprep.subr.mxu0 0.0
    %1021 = vmatpush1.msra.mxu0 0.0
    %1022 = vmatprep.subr.mxu0 0.0
    %1023 = vmatpush1.msra.mxu0 0.0
    %1024 = vmatprep.subr.mxu0 0.0
    %1025 = vmatpush1.msra.mxu0 0.0
    %1026 = vmatprep.subr.mxu0 0.0
    %1027 = vmatpush1.msra.mxu0 0.0
    %1028 = vmatprep.subr.mxu0 0.0
    %1029 = vmatpush1.msra.mxu0 0.0
    %1030 = vmatprep.subr.mxu0 0.0
    %1031 = vmatpush1.msra.mxu0 0.0
    %1032 = vmatprep.subr.mxu0 0.0
    %1033 = vmatpush1.msra.mxu0 0.0
    %1034 = vmatprep.subr.mxu0 0.0
    %1035 = vmatpush1.msra.mxu0 0.0
    %1036 = vmatprep.subr.mxu0 0.0
    %v1037 = vand.u32 %v997, 4294901760
    %1038 = vmatpush1.msra.mxu0 %v1037
    %1039 = vmatprep.subr.mxu0 0.0
    %1040 = vmatpush2.msra.mxu0 0.0
    %1041 = vmatprep.subr.mxu0 0.0
    %1042 = vmatpush2.msra.mxu0 0.0
    %1043 = vmatprep.subr.mxu0 0.0
    %1044 = vmatpush2.msra.mxu0 0.0
    %1045 = vmatprep.subr.mxu0 0.0
    %1046 = vmatpush2.msra.mxu0 0.0
    %1047 = vmatprep.subr.mxu0 0.0
    %1048 = vmatpush2.msra.mxu0 0.0
    %1049 = vmatprep.subr.mxu0 0.0
    %1050 = vmatpush2.msra.mxu0 0.0
    %1051 = vmatprep.subr.mxu0 0.0
    %1052 = vmatpush2.msra.mxu0 0.0
    %1053 = vmatprep.subr.mxu0 0.0
    %1054 = vmatpush2.msra.mxu0 0.0
    %1055 = vmatprep.subr.mxu0 0.0
    %1056 = vmatpush2.msra.mxu0 0.0
    %1057 = vmatprep.subr.mxu0 0.0
    %1058 = vmatpush2.msra.mxu0 0.0
    %1059 = vmatprep.subr.mxu0 0.0
    %1060 = vmatpush2.msra.mxu0 0.0
    %1061 = vmatprep.subr.mxu0 0.0
    %1062 = vmatpush2.msra.mxu0 0.0
    %1063 = vmatprep.subr.mxu0 0.0
    %1064 = vmatpush2.msra.mxu0 0.0
    %1065 = vmatprep.subr.mxu0 0.0
    %1066 = vmatpush2.msra.mxu0 0.0
    %1067 = vmatprep.subr.mxu0 0.0
    %1068 = vmatpush2.msra.mxu0 0.0
    %1069 = vmatprep.subr.mxu0 0.0
    %1070 = vmatpush2.msra.mxu0 0.0
    %1071 = vmatprep.mubr.f32.mxu0 0.0
    %v1072 = vand.u32 %v1004, 4294901760
    %v1073 = vsub.f32 %v1004, %v1072
    %v1074 = vand.u32 %v1073, 4294901760
    %v1075 = vsub.f32 %v1073, %v1074
    %v1076 = vand.u32 %v1075, 4294901760
    %1077 = vmatmul.mubr.f32.gmra.mxu0 %v1076
    %v1078 = vpop.f32.mrf.mxu0
    %v1079 = vadd.f32 %v1001, %v1078
    %v1080 = vpop.f32.mrf.mxu0
    %1081 = vdwg.mxu0
    %1082 = vmatprep.subr.mxu0 0.0
    %1083 = vmatpush1.msra.mxu0 0.0
    %1084 = vmatprep.subr.mxu0 0.0
    %1085 = vmatpush1.msra.mxu0 0.0
    %1086 = vmatprep.subr.mxu0 0.0
    %1087 = vmatpush1.msra.mxu0 0.0
    %1088 = vmatprep.subr.mxu0 0.0
    %1089 = vmatpush1.msra.mxu0 0.0
    %1090 = vmatprep.subr.mxu0 0.0
    %1091 = vmatpush1.msra.mxu0 0.0
    %1092 = vmatprep.subr.mxu0 0.0
    %1093 = vmatpush1.msra.mxu0 0.0
    %1094 = vmatprep.subr.mxu0 0.0
    %1095 = vmatpush1.msra.mxu0 0.0
    %1096 = vmatprep.subr.mxu0 0.0
    %1097 = vmatpush1.msra.mxu0 0.0
    %1098 = vmatprep.subr.mxu0 0.0
    %1099 = vmatpush1.msra.mxu0 0.0
    %1100 = vmatprep.subr.mxu0 0.0
    %1101 = vmatpush1.msra.mxu0 0.0
    %1102 = vmatprep.subr.mxu0 0.0
    %1103 = vmatpush1.msra.mxu0 0.0
    %1104 = vmatprep.subr.mxu0 0.0
    %1105 = vmatpush1.msra.mxu0 0.0
    %1106 = vmatprep.subr.mxu0 0.0
    %1107 = vmatpush1.msra.mxu0 0.0
    %1108 = vmatprep.subr.mxu0 0.0
    %1109 = vmatpush1.msra.mxu0 0.0
    %1110 = vmatprep.subr.mxu0 0.0
    %1111 = vmatpush1.msra.mxu0 0.0
    %1112 = vmatprep.subr.mxu0 0.0
    %v1113 = vand.u32 %v997, 4294901760
    %v1114 = vsub.f32 %v997, %v1113
    %v1115 = vand.u32 %v1114, 4294901760
    %v1116 = vsub.f32 %v1114, %v1115
    %v1117 = vand.u32 %v1116, 4294901760
    %1118 = vmatpush1.msra.mxu0 %v1117
    %1119 = vmatprep.subr.mxu0 0.0
    %1120 = vmatpush2.msra.mxu0 0.0
    %1121 = vmatprep.subr.mxu0 0.0
    %1122 = vmatpush2.msra.mxu0 0.0
    %1123 = vmatprep.subr.mxu0 0.0
    %1124 = vmatpush2.msra.mxu0 0.0
    %1125 = vmatprep.subr.mxu0 0.0
    %1126 = vmatpush2.msra.mxu0 0.0
    %1127 = vmatprep.subr.mxu0 0.0
    %1128 = vmatpush2.msra.mxu0 0.0
    %1129 = vmatprep.subr.mxu0 0.0
    %1130 = vmatpush2.msra.mxu0 0.0
    %1131 = vmatprep.subr.mxu0 0.0
    %1132 = vmatpush2.msra.mxu0 0.0
    %1133 = vmatprep.subr.mxu0 0.0
    %1134 = vmatpush2.msra.mxu0 0.0
    %1135 = vmatprep.subr.mxu0 0.0
    %1136 = vmatpush2.msra.mxu0 0.0
    %1137 = vmatprep.subr.mxu0 0.0
    %1138 = vmatpush2.msra.mxu0 0.0
    %1139 = vmatprep.subr.mxu0 0.0
    %1140 = vmatpush2.msra.mxu0 0.0
    %1141 = vmatprep.subr.mxu0 0.0
    %1142 = vmatpush2.msra.mxu0 0.0
    %1143 = vmatprep.subr.mxu0 0.0
    %1144 = vmatpush2.msra.mxu0 0.0
    %1145 = vmatprep.subr.mxu0 0.0
    %1146 = vmatpush2.msra.mxu0 0.0
    %1147 = vmatprep.subr.mxu0 0.0
    %1148 = vmatpush2.msra.mxu0 0.0
    %1149 = vmatprep.subr.mxu0 0.0
    %1150 = vmatpush2.msra.mxu0 0.0
    %1151 = vmatprep.mubr.f32.mxu0 0.0
    %v1152 = vand.u32 %v1004, 4294901760
    %1153 = vmatmul.mubr.f32.gmra.mxu0 %v1152
    %v1154 = vpop.f32.mrf.mxu0
    %v1155 = vadd.f32 %v1079, %v1154
    %v1156 = vpop.f32.mrf.mxu0
    %1157 = vdwg.mxu0
    %1158 = vmatprep.subr.mxu0 0.0
    %1159 = vmatpush1.msra.mxu0 0.0
    %1160 = vmatprep.subr.mxu0 0.0
    %1161 = vmatpush1.msra.mxu0 0.0
    %1162 = vmatprep.subr.mxu0 0.0
    %1163 = vmatpush1.msra.mxu0 0.0
    %1164 = vmatprep.subr.mxu0 0.0
    %1165 = vmatpush1.msra.mxu0 0.0
    %1166 = vmatprep.subr.mxu0 0.0
    %1167 = vmatpush1.msra.mxu0 0.0
    %1168 = vmatprep.subr.mxu0 0.0
    %1169 = vmatpush1.msra.mxu0 0.0
    %1170 = vmatprep.subr.mxu0 0.0
    %1171 = vmatpush1.msra.mxu0 0.0
    %1172 = vmatprep.subr.mxu0 0.0
    %1173 = vmatpush1.msra.mxu0 0.0
    %1174 = vmatprep.subr.mxu0 0.0
    %1175 = vmatpush1.msra.mxu0 0.0
    %1176 = vmatprep.subr.mxu0 0.0
    %1177 = vmatpush1.msra.mxu0 0.0
    %1178 = vmatprep.subr.mxu0 0.0
    %1179 = vmatpush1.msra.mxu0 0.0
    %1180 = vmatprep.subr.mxu0 0.0
    %1181 = vmatpush1.msra.mxu0 0.0
    %1182 = vmatprep.subr.mxu0 0.0
    %1183 = vmatpush1.msra.mxu0 0.0
    %1184 = vmatprep.subr.mxu0 0.0
    %1185 = vmatpush1.msra.mxu0 0.0
    %1186 = vmatprep.subr.mxu0 0.0
    %1187 = vmatpush1.msra.mxu0 0.0
    %1188 = vmatprep.subr.mxu0 0.0
    %v1189 = vand.u32 %v997, 4294901760
    %v1190 = vsub.f32 %v997, %v1189
    %1191 = vmatpush1.msra.mxu0 %v1190
    %1192 = vmatprep.subr.mxu0 0.0
    %1193 = vmatpush2.msra.mxu0 0.0
    %1194 = vmatprep.subr.mxu0 0.0
    %1195 = vmatpush2.msra.mxu0 0.0
    %1196 = vmatprep.subr.mxu0 0.0
    %1197 = vmatpush2.msra.mxu0 0.0
    %1198 = vmatprep.subr.mxu0 0.0
    %1199 = vmatpush2.msra.mxu0 0.0
    %1200 = vmatprep.subr.mxu0 0.0
    %1201 = vmatpush2.msra.mxu0 0.0
    %1202 = vmatprep.subr.mxu0 0.0
    %1203 = vmatpush2.msra.mxu0 0.0
    %1204 = vmatprep.subr.mxu0 0.0
    %1205 = vmatpush2.msra.mxu0 0.0
    %1206 = vmatprep.subr.mxu0 0.0
    %1207 = vmatpush2.msra.mxu0 0.0
    %1208 = vmatprep.subr.mxu0 0.0
    %1209 = vmatpush2.msra.mxu0 0.0
    %1210 = vmatprep.subr.mxu0 0.0
    %1211 = vmatpush2.msra.mxu0 0.0
    %1212 = vmatprep.subr.mxu0 0.0
    %1213 = vmatpush2.msra.mxu0 0.0
    %1214 = vmatprep.subr.mxu0 0.0
    %1215 = vmatpush2.msra.mxu0 0.0
    %1216 = vmatprep.subr.mxu0 0.0
    %1217 = vmatpush2.msra.mxu0 0.0
    %1218 = vmatprep.subr.mxu0 0.0
    %1219 = vmatpush2.msra.mxu0 0.0
    %1220 = vmatprep.subr.mxu0 0.0
    %1221 = vmatpush2.msra.mxu0 0.0
    %1222 = vmatprep.subr.mxu0 0.0
    %1223 = vmatpush2.msra.mxu0 0.0
    %1224 = vmatprep.mubr.f32.mxu0 0.0
    %v1225 = vand.u32 %v1004, 4294901760
    %v1226 = vsub.f32 %v1004, %v1225
    %1227 = vmatmul.mubr.f32.gmra.mxu0 %v1226
    %v1228 = vpop.f32.mrf.mxu0
    %v1229 = vadd.f32 %v1155, %v1228
    %v1230 = vpop.f32.mrf.mxu0
    %1231 = vdwg.mxu0
    %1232 = vmatprep.subr.mxu0 0.0
    %1233 = vmatpush1.msra.mxu0 0.0
    %1234 = vmatprep.subr.mxu0 0.0
    %1235 = vmatpush1.msra.mxu0 0.0
    %1236 = vmatprep.subr.mxu0 0.0
    %1237 = vmatpush1.msra.mxu0 0.0
    %1238 = vmatprep.subr.mxu0 0.0
    %1239 = vmatpush1.msra.mxu0 0.0
    %1240 = vmatprep.subr.mxu0 0.0
    %1241 = vmatpush1.msra.mxu0 0.0
    %1242 = vmatprep.subr.mxu0 0.0
    %1243 = vmatpush1.msra.mxu0 0.0
    %1244 = vmatprep.subr.mxu0 0.0
    %1245 = vmatpush1.msra.mxu0 0.0
    %1246 = vmatprep.subr.mxu0 0.0
    %1247 = vmatpush1.msra.mxu0 0.0
    %1248 = vmatprep.subr.mxu0 0.0
    %1249 = vmatpush1.msra.mxu0 0.0
    %1250 = vmatprep.subr.mxu0 0.0
    %1251 = vmatpush1.msra.mxu0 0.0
    %1252 = vmatprep.subr.mxu0 0.0
    %1253 = vmatpush1.msra.mxu0 0.0
    %1254 = vmatprep.subr.mxu0 0.0
    %1255 = vmatpush1.msra.mxu0 0.0
    %1256 = vmatprep.subr.mxu0 0.0
    %1257 = vmatpush1.msra.mxu0 0.0
    %1258 = vmatprep.subr.mxu0 0.0
    %1259 = vmatpush1.msra.mxu0 0.0
    %1260 = vmatprep.subr.mxu0 0.0
    %1261 = vmatpush1.msra.mxu0 0.0
    %1262 = vmatprep.subr.mxu0 0.0
    %v1263 = vand.u32 %v997, 4294901760
    %1264 = vmatpush1.msra.mxu0 %v1263
    %1265 = vmatprep.subr.mxu0 0.0
    %1266 = vmatpush2.msra.mxu0 0.0
    %1267 = vmatprep.subr.mxu0 0.0
    %1268 = vmatpush2.msra.mxu0 0.0
    %1269 = vmatprep.subr.mxu0 0.0
    %1270 = vmatpush2.msra.mxu0 0.0
    %1271 = vmatprep.subr.mxu0 0.0
    %1272 = vmatpush2.msra.mxu0 0.0
    %1273 = vmatprep.subr.mxu0 0.0
    %1274 = vmatpush2.msra.mxu0 0.0
    %1275 = vmatprep.subr.mxu0 0.0
    %1276 = vmatpush2.msra.mxu0 0.0
    %1277 = vmatprep.subr.mxu0 0.0
    %1278 = vmatpush2.msra.mxu0 0.0
    %1279 = vmatprep.subr.mxu0 0.0
    %1280 = vmatpush2.msra.mxu0 0.0
    %1281 = vmatprep.subr.mxu0 0.0
    %1282 = vmatpush2.msra.mxu0 0.0
    %1283 = vmatprep.subr.mxu0 0.0
    %1284 = vmatpush2.msra.mxu0 0.0
    %1285 = vmatprep.subr.mxu0 0.0
    %1286 = vmatpush2.msra.mxu0 0.0
    %1287 = vmatprep.subr.mxu0 0.0
    %1288 = vmatpush2.msra.mxu0 0.0
    %1289 = vmatprep.subr.mxu0 0.0
    %1290 = vmatpush2.msra.mxu0 0.0
    %1291 = vmatprep.subr.mxu0 0.0
    %1292 = vmatpush2.msra.mxu0 0.0
    %1293 = vmatprep.subr.mxu0 0.0
    %1294 = vmatpush2.msra.mxu0 0.0
    %1295 = vmatprep.subr.mxu0 0.0
    %1296 = vmatpush2.msra.mxu0 0.0
    %1297 = vmatprep.mubr.f32.mxu0 0.0
    %v1298 = vand.u32 %v1004, 4294901760
    %v1299 = vsub.f32 %v1004, %v1298
    %v1300 = vand.u32 %v1299, 4294901760
    %1301 = vmatmul.mubr.f32.gmra.mxu0 %v1300
    %v1302 = vpop.f32.mrf.mxu0
    %v1303 = vadd.f32 %v1229, %v1302
    %v1304 = vpop.f32.mrf.mxu0
    %1305 = vdwg.mxu0
    %1306 = vmatprep.subr.mxu0 0.0
    %1307 = vmatpush1.msra.mxu0 0.0
    %1308 = vmatprep.subr.mxu0 0.0
    %1309 = vmatpush1.msra.mxu0 0.0
    %1310 = vmatprep.subr.mxu0 0.0
    %1311 = vmatpush1.msra.mxu0 0.0
    %1312 = vmatprep.subr.mxu0 0.0
    %1313 = vmatpush1.msra.mxu0 0.0
    %1314 = vmatprep.subr.mxu0 0.0
    %1315 = vmatpush1.msra.mxu0 0.0
    %1316 = vmatprep.subr.mxu0 0.0
    %1317 = vmatpush1.msra.mxu0 0.0
    %1318 = vmatprep.subr.mxu0 0.0
    %1319 = vmatpush1.msra.mxu0 0.0
    %1320 = vmatprep.subr.mxu0 0.0
    %1321 = vmatpush1.msra.mxu0 0.0
    %1322 = vmatprep.subr.mxu0 0.0
    %1323 = vmatpush1.msra.mxu0 0.0
    %1324 = vmatprep.subr.mxu0 0.0
    %1325 = vmatpush1.msra.mxu0 0.0
    %1326 = vmatprep.subr.mxu0 0.0
    %1327 = vmatpush1.msra.mxu0 0.0
    %1328 = vmatprep.subr.mxu0 0.0
    %1329 = vmatpush1.msra.mxu0 0.0
    %1330 = vmatprep.subr.mxu0 0.0
    %1331 = vmatpush1.msra.mxu0 0.0
    %1332 = vmatprep.subr.mxu0 0.0
    %1333 = vmatpush1.msra.mxu0 0.0
    %1334 = vmatprep.subr.mxu0 0.0
    %1335 = vmatpush1.msra.mxu0 0.0
    %1336 = vmatprep.subr.mxu0 0.0
    %v1337 = vand.u32 %v997, 4294901760
    %v1338 = vsub.f32 %v997, %v1337
    %v1339 = vand.u32 %v1338, 4294901760
    %1340 = vmatpush1.msra.mxu0 %v1339
    %1341 = vmatprep.subr.mxu0 0.0
    %1342 = vmatpush2.msra.mxu0 0.0
    %1343 = vmatprep.subr.mxu0 0.0
    %1344 = vmatpush2.msra.mxu0 0.0
    %1345 = vmatprep.subr.mxu0 0.0
    %1346 = vmatpush2.msra.mxu0 0.0
    %1347 = vmatprep.subr.mxu0 0.0
    %1348 = vmatpush2.msra.mxu0 0.0
    %1349 = vmatprep.subr.mxu0 0.0
    %1350 = vmatpush2.msra.mxu0 0.0
    %1351 = vmatprep.subr.mxu0 0.0
    %1352 = vmatpush2.msra.mxu0 0.0
    %1353 = vmatprep.subr.mxu0 0.0
    %1354 = vmatpush2.msra.mxu0 0.0
    %1355 = vmatprep.subr.mxu0 0.0
    %1356 = vmatpush2.msra.mxu0 0.0
    %1357 = vmatprep.subr.mxu0 0.0
    %1358 = vmatpush2.msra.mxu0 0.0
    %1359 = vmatprep.subr.mxu0 0.0
    %1360 = vmatpush2.msra.mxu0 0.0
    %1361 = vmatprep.subr.mxu0 0.0
    %1362 = vmatpush2.msra.mxu0 0.0
    %1363 = vmatprep.subr.mxu0 0.0
    %1364 = vmatpush2.msra.mxu0 0.0
    %1365 = vmatprep.subr.mxu0 0.0
    %1366 = vmatpush2.msra.mxu0 0.0
    %1367 = vmatprep.subr.mxu0 0.0
    %1368 = vmatpush2.msra.mxu0 0.0
    %1369 = vmatprep.subr.mxu0 0.0
    %1370 = vmatpush2.msra.mxu0 0.0
    %1371 = vmatprep.subr.mxu0 0.0
    %1372 = vmatpush2.msra.mxu0 0.0
    %1373 = vmatprep.mubr.f32.mxu0 0.0
    %v1374 = vand.u32 %v1004, 4294901760
    %1375 = vmatmul.mubr.f32.gmra.mxu0 %v1374
    %v1376 = vpop.f32.mrf.mxu0
    %v1377 = vadd.f32 %v1303, %v1376
    %v1378 = vpop.f32.mrf.mxu0
    %1379 = vdwg.mxu0
    %1380 = vmatprep.subr.mxu0 0.0
    %1381 = vmatpush1.msra.mxu0 0.0
    %1382 = vmatprep.subr.mxu0 0.0
    %1383 = vmatpush1.msra.mxu0 0.0
    %1384 = vmatprep.subr.mxu0 0.0
    %1385 = vmatpush1.msra.mxu0 0.0
    %1386 = vmatprep.subr.mxu0 0.0
    %1387 = vmatpush1.msra.mxu0 0.0
    %1388 = vmatprep.subr.mxu0 0.0
    %1389 = vmatpush1.msra.mxu0 0.0
    %1390 = vmatprep.subr.mxu0 0.0
    %1391 = vmatpush1.msra.mxu0 0.0
    %1392 = vmatprep.subr.mxu0 0.0
    %1393 = vmatpush1.msra.mxu0 0.0
    %1394 = vmatprep.subr.mxu0 0.0
    %1395 = vmatpush1.msra.mxu0 0.0
    %1396 = vmatprep.subr.mxu0 0.0
    %1397 = vmatpush1.msra.mxu0 0.0
    %1398 = vmatprep.subr.mxu0 0.0
    %1399 = vmatpush1.msra.mxu0 0.0
    %1400 = vmatprep.subr.mxu0 0.0
    %1401 = vmatpush1.msra.mxu0 0.0
    %1402 = vmatprep.subr.mxu0 0.0
    %1403 = vmatpush1.msra.mxu0 0.0
    %1404 = vmatprep.subr.mxu0 0.0
    %1405 = vmatpush1.msra.mxu0 0.0
    %1406 = vmatprep.subr.mxu0 0.0
    %1407 = vmatpush1.msra.mxu0 0.0
    %1408 = vmatprep.subr.mxu0 0.0
    %1409 = vmatpush1.msra.mxu0 0.0
    %1410 = vmatprep.subr.mxu0 0.0
    %v1411 = vand.u32 %v997, 4294901760
    %1412 = vmatpush1.msra.mxu0 %v1411
    %1413 = vmatprep.subr.mxu0 0.0
    %1414 = vmatpush2.msra.mxu0 0.0
    %1415 = vmatprep.subr.mxu0 0.0
    %1416 = vmatpush2.msra.mxu0 0.0
    %1417 = vmatprep.subr.mxu0 0.0
    %1418 = vmatpush2.msra.mxu0 0.0
    %1419 = vmatprep.subr.mxu0 0.0
    %1420 = vmatpush2.msra.mxu0 0.0
    %1421 = vmatprep.subr.mxu0 0.0
    %1422 = vmatpush2.msra.mxu0 0.0
    %1423 = vmatprep.subr.mxu0 0.0
    %1424 = vmatpush2.msra.mxu0 0.0
    %1425 = vmatprep.subr.mxu0 0.0
    %1426 = vmatpush2.msra.mxu0 0.0
    %1427 = vmatprep.subr.mxu0 0.0
    %1428 = vmatpush2.msra.mxu0 0.0
    %1429 = vmatprep.subr.mxu0 0.0
    %1430 = vmatpush2.msra.mxu0 0.0
    %1431 = vmatprep.subr.mxu0 0.0
    %1432 = vmatpush2.msra.mxu0 0.0
    %1433 = vmatprep.subr.mxu0 0.0
    %1434 = vmatpush2.msra.mxu0 0.0
    %1435 = vmatprep.subr.mxu0 0.0
    %1436 = vmatpush2.msra.mxu0 0.0
    %1437 = vmatprep.subr.mxu0 0.0
    %1438 = vmatpush2.msra.mxu0 0.0
    %1439 = vmatprep.subr.mxu0 0.0
    %1440 = vmatpush2.msra.mxu0 0.0
    %1441 = vmatprep.subr.mxu0 0.0
    %1442 = vmatpush2.msra.mxu0 0.0
    %1443 = vmatprep.subr.mxu0 0.0
    %1444 = vmatpush2.msra.mxu0 0.0
    %1445 = vmatprep.mubr.f32.mxu0 0.0
    %v1446 = vand.u32 %v1004, 4294901760
    %1447 = vmatmul.mubr.f32.gmra.mxu0 %v1446
    %v1448 = vpop.f32.mrf.mxu0
    %v1449 = vadd.f32 %v1377, %v1448
    %v1450 = vpop.f32.mrf.mxu0
    %1451 = vdwg.mxu0
    %v1452 = vxor.u32 %v1449, 2147483648
    %v1453 = vmul.f32 %v1452, 1.442695
    %v1454 = vpow.pop %v1453
    %v1455 = vadd.f32 %v1454, 1.0
    %v1456 = vrcp.pop %v1455
    %v1457 = vmul.f32 1.0, %v1456
    %vm1458 = vcmask 57344
    %1459 = vst.msk [vmem:[#allocation2] sm:$0x1] %vm1458, %v1457
    // Predicated region
    $region10: #{tpu_custom_call.1} parent=1 // pred_check
      _
    $region11: #{tpu_custom_call.1} parent=1 // pred_check_branch
      %1461 = sbr.rel (0) target = $region13
    $region12: #{tpu_custom_call.1} parent=1 // pred_region
      %s1463 = ssub.s32 16, 16
      %1464 = vsyncadd [#allocation3], %s1463
      %s1466 = sshll.u32 [#allocation2], 4
      %s1467 = int_to_ptr.vmem [resolvable:$true] %s1466
      %1469 = dma.vmem_to_hbm [thread:$0]  %s1467, 16, %s2, [#allocation3]
    $region13: #{tpu_custom_call.1} parent=1 // pred_fallthru
      _
    // Predicated region
    $region14: #{tpu_custom_call.1} parent=1 // pred_check
      _
    $region15: #{tpu_custom_call.1} parent=1 // pred_check_branch
      %1471 = sbr.rel (0) target = $region17
    $region16: #{tpu_custom_call.1} parent=1 // pred_region
      %1472 = dma.done [#allocation3], 16
    $region17: #{tpu_custom_call.1} parent=1 // pred_fallthru
      _
    %1473 = vsyncpa [#allocation3], 1

</llo_original>
